<compile_context>
chip_gen: v7x
topology: tpu7x:2x2x1
jax: 0.10.0
libtpu: 0.0.40
codegen_flags: <defaults>
</compile_context>

<pallas_src>
import functools

import jax
import jax.numpy as jnp
from jax.experimental import pallas as pl
from jax.experimental.pallas import tpu as pltpu


def cbam_kernel(x_ref, w1_ref, w2_ref, ws1tf_ref, ws2all_ref,
                bn1b_ref, bn2b_ref, ws3p_ref, masks_ref, o_ref,
                *, B, H, W, C, Cr):
    HW = H * W
    R = B * HW

    xb = x_ref[...]                                                    # (B, HW, C) native dtype

    # ---- channel attention: per-image global avg pool -> mlp -> sigmoid ----
    avg = jnp.mean(xb.astype(jnp.float32), axis=1)                     # (B, C)
    hca = jax.nn.relu(jnp.dot(avg, w1_ref[...],
                              preferred_element_type=jnp.float32))     # (B, Cr)
    ca = jax.nn.sigmoid(jnp.dot(hca, w2_ref[...],
                                preferred_element_type=jnp.float32))   # (B, C)
    x1 = xb * ca[:, None, :].astype(xb.dtype)                          # (B, HW, C), native dtype
    x1r = x1.reshape(R, C)                                             # leading-dim merge (free)

    # ---- spatial attention, carried lane-dense in the transposed (Cr, R) layout ----
    # h1_t[o, r] = relu(sum_c ws1[c,o]*bn1s[o] * x1[r,c] + bn1b[o]); NT dot_general
    # (contract last dims of both operands) produces it already transposed.
    h1_t = jax.nn.relu(
        jax.lax.dot_general(ws1tf_ref[...].astype(x1r.dtype), x1r,
                            (((1,), (1,)), ((), ())),
                            preferred_element_type=jnp.float32)
        + bn1b_ref[...])                                               # (Cr, R)

    # 3x3 conv (padding=1): lane rolls along the fused pixel axis + precomputed
    # edge masks; all 9 taps concatenated into a single K = 9*Cr matmul.
    taps = []
    t = 0
    for dy in (-1, 0, 1):
        for dx in (-1, 0, 1):
            off = dy * W + dx
            if off == 0:
                taps.append(h1_t)                                      # center tap: mask is all-ones
            else:
                sh = pltpu.roll(h1_t, shift=(-off) % R, axis=1)        # lane roll (XLU)
                taps.append(sh * masks_ref[t])                         # (Cr, R) * (1, R)
            t += 1
    tap_cat = jnp.concatenate(taps, axis=0)                            # (9*Cr, R)
    h2_t = jax.nn.relu(
        jnp.dot(ws2all_ref[...], tap_cat,
                preferred_element_type=jnp.float32) + bn2b_ref[...])   # (Cr, R)

    # Final 1x1 conv to one channel + sigmoid.  TN dot_general (contract dim 0 of
    # both operands) moves the result back to pixel-major layout; column 0 of
    # ws3p carries the weights, the other 127 columns are zero and are discarded.
    g = jax.lax.dot_general(h2_t, ws3p_ref[...],
                            (((0,), (0,)), ((), ())),
                            preferred_element_type=jnp.float32)        # (R, 128)
    sa = jax.nn.sigmoid(g[:, 0:1])                                     # (R, 1)

    out = x1r * sa.astype(x1r.dtype)                                   # (R, C), native dtype
    o_ref[...] = out.reshape(B, HW, C).astype(o_ref.dtype)


def _pick_block_n(N, HW, C, *, target_steps=4, vmem_budget=24 * 1024 * 1024):
    """Largest batch block that fits a VMEM budget while keeping >= target grid steps."""
    divisors = [d for d in range(1, N + 1) if N % d == 0]

    def est(d):
        # ~6 live copies of the (d, HW, C) f32 block: double-buffered in/out blocks
        # plus the in-kernel temporaries (x1, pre-cast out, transposed branch slack).
        return d * HW * C * 4 * 6

    for min_steps in (target_steps, 2, 1):
        cands = [d for d in divisors if N // d >= min_steps and est(d) <= vmem_budget]
        if cands:
            return max(cands)
    return 1


def cbam_pallas(x, w1, w2, ws1, ws2, ws3, bn1s, bn1b, bn2s, bn2b, *, block_n=None):
    N, H, W, C = x.shape
    Cr = ws1.shape[1]
    HW = H * W

    if block_n is None:
        block_n = _pick_block_n(N, HW, C)
    assert N % block_n == 0, "batch must be divisible by block_n"
    R = block_n * HW

    # NOTE: keep C a multiple of 128 for lane-dense loads/stores of the big slabs
    # (masked partial vst otherwise); the demo uses C = 128.
    x2 = x.reshape(N, HW, C)                       # channels stay on the lane axis

    bn1s_v = bn1s.reshape(Cr)
    bn1b_v = bn1b.reshape(Cr)
    bn2s_v = bn2s.reshape(Cr)
    bn2b_v = bn2b.reshape(Cr)

    # Fold BN scales into the conv weights host-side; pre-transpose for the kernel.
    ws1tf = (ws1 * bn1s_v[None, :]).T.astype(jnp.float32)              # (Cr, C)
    ws2f = ws2.reshape(9, Cr, Cr) * bn2s_v[None, None, :]              # (t, r, s) * bn2s[s]
    ws2all = jnp.transpose(ws2f, (2, 0, 1)).reshape(Cr, 9 * Cr).astype(jnp.float32)
    bn1b_col = bn1b_v.reshape(Cr, 1).astype(jnp.float32)
    bn2b_col = bn2b_v.reshape(Cr, 1).astype(jnp.float32)
    ws3p = jnp.zeros((Cr, 128), jnp.float32).at[:, 0].set(ws3.reshape(Cr).astype(jnp.float32))

    # 3x3 edge-validity masks: pattern repeats per image along the fused pixel axis.
    hh = jnp.arange(H).reshape(H, 1)
    ww = jnp.arange(W).reshape(1, W)
    rows = []
    for dy in (-1, 0, 1):
        for dx in (-1, 0, 1):
            v = ((hh + dy >= 0) & (hh + dy < H) & (ww + dx >= 0) & (ww + dx < W))
            rows.append(jnp.tile(v.astype(jnp.float32).reshape(1, HW), (1, block_n)))
    masks = jnp.stack(rows, axis=0)                                    # (9, 1, R)

    def full(shape):
        return pl.BlockSpec(shape, lambda n, _l=len(shape): (0,) * _l)

    out = pl.pallas_call(
        functools.partial(cbam_kernel, B=block_n, H=H, W=W, C=C, Cr=Cr),
        out_shape=jax.ShapeDtypeStruct((N, HW, C), x.dtype),
        grid_spec=pltpu.PrefetchScalarGridSpec(
            num_scalar_prefetch=0,
            grid=(N // block_n,),
            in_specs=[
                pl.BlockSpec((block_n, HW, C), lambda n: (n, 0, 0)),   # x (B images / step)
                full((C, Cr)),        # w1  : channel-attn 1x1 conv #1
                full((Cr, C)),        # w2  : channel-attn 1x1 conv #2
                full((Cr, C)),        # ws1tf : spatial 1x1 conv #1, bn1 scale folded, transposed
                full((Cr, 9 * Cr)),   # ws2all: spatial 3x3 conv, bn2 scale folded, tap-major K
                full((Cr, 1)),        # bn1 bias (column)
                full((Cr, 1)),        # bn2 bias (column)
                full((Cr, 128)),      # ws3 in column 0, zeros elsewhere
                full((9, 1, R)),      # edge-validity masks
            ],
            out_specs=pl.BlockSpec((block_n, HW, C), lambda n: (n, 0, 0)),
        ),
        compiler_params=pltpu.CompilerParams(
            dimension_semantics=("parallel",),
            vmem_limit_bytes=32 * 1024 * 1024),
    )(x2, w1, w2, ws1tf, ws2all, bn1b_col, bn2b_col, ws3p, masks)
    return out.reshape(N, H, W, C)


def cbam_reference(x, w1, w2, ws1, ws2, ws3, bn1s, bn1b, bn2s, bn2b):
    N, H, W, C = x.shape
    avg = x.mean(axis=(1, 2))                                          # (N, C)
    ca = jax.nn.sigmoid(jax.nn.relu(avg @ w1) @ w2)                    # (N, C)
    x1 = x * ca[:, None, None, :]
    h1 = jax.nn.relu(jnp.einsum('nhwc,cr->nhwr', x1, ws1) * bn1s + bn1b)
    hp = jnp.pad(h1, ((0, 0), (1, 1), (1, 1), (0, 0)))
    acc = jnp.zeros(h1.shape, jnp.float32)
    for ky in range(3):
        for kx in range(3):
            acc = acc + jnp.einsum('nhwr,rs->nhws',
                                   hp[:, ky:ky + H, kx:kx + W, :], ws2[ky, kx])
    h2 = jax.nn.relu(acc * bn2s + bn2b)
    sa = jax.nn.sigmoid(jnp.einsum('nhwr,ro->nhwo', h2, ws3))
    return x1 * sa


if __name__ == "__main__":
    # Small shapes consistent with the module defaults: channels=128, reduction=16 -> Cr=8.
    # C=128 keeps the big input/output slabs lane-dense; block_n=2 -> 4 grid steps, R=128.
    N, C, H, W = 8, 128, 8, 8
    reduction = 16
    Cr = C // reduction

    key = jax.random.PRNGKey(0)
    ks = jax.random.split(key, 6)

    # NHWC input (equivalent to PyTorch NCHW [N, C, H, W] transposed).
    x = jax.random.normal(ks[0], (N, H, W, C), jnp.float32)

    # Conv weights. PyTorch Conv2d weight is (out, in, kh, kw); here stored as
    # (in, out) / (kh, kw, in, out) so the host-side folding is plain right-matmul form.
    w1 = 0.1 * jax.random.normal(ks[1], (C, Cr), jnp.float32)          # ca conv1: C -> Cr
    w2 = 0.1 * jax.random.normal(ks[2], (Cr, C), jnp.float32)          # ca conv2: Cr -> C
    ws1 = 0.1 * jax.random.normal(ks[3], (C, Cr), jnp.float32)         # sa conv1x1: C -> Cr
    ws2 = 0.1 * jax.random.normal(ks[4], (3, 3, Cr, Cr), jnp.float32)  # sa conv3x3: Cr -> Cr
    ws3 = 0.1 * jax.random.normal(ks[5], (Cr, 1), jnp.float32)         # sa conv1x1: Cr -> 1

    # BatchNorm (eval mode) params, folded into scale/bias.
    eps = 1e-5

    def fold_bn(gamma, beta, mean, var):
        scale = gamma / jnp.sqrt(var + eps)
        bias = beta - mean * scale
        return scale.reshape(1, -1), bias.reshape(1, -1)

    r = jnp.arange(Cr, dtype=jnp.float32)
    bn1s, bn1b = fold_bn(1.0 + 0.10 * r, 0.05 * r, 0.02 * r, 1.0 + 0.03 * r)
    bn2s, bn2b = fold_bn(1.0 - 0.05 * r, -0.03 * r, 0.01 * r, 1.0 + 0.02 * r)

    out = cbam_pallas(x, w1, w2, ws1, ws2, ws3, bn1s, bn1b, bn2s, bn2b)
    out = jax.block_until_ready(out)

    ref = cbam_reference(x, w1, w2, ws1, ws2, ws3, bn1s, bn1b, bn2s, bn2b)
    assert out.shape == (N, H, W, C) and out.dtype == x.dtype
    # Tolerance allows for MXU precision differences between the Pallas matmuls
    # and the XLA reference einsums; structural bugs produce >> 1e-2 errors.
    assert jnp.allclose(out, ref, atol=1e-2, rtol=1e-2), \
        f"max err = {jnp.max(jnp.abs(out - ref))}"

    print("KERNEL_OK")
</pallas_src>

<mosaic_0001>
module attributes {stable_mosaic.version = 11 : i64} {
  func.func @cbam_kernel(%arg0: i32, %arg1: memref<2x64x128xf32, #tpu.memory_space<vmem>>, %arg2: memref<128x8xf32, #tpu.memory_space<vmem>>, %arg3: memref<8x128xf32, #tpu.memory_space<vmem>>, %arg4: memref<8x128xf32, #tpu.memory_space<vmem>>, %arg5: memref<8x72xf32, #tpu.memory_space<vmem>>, %arg6: memref<8x1xf32, #tpu.memory_space<vmem>>, %arg7: memref<8x1xf32, #tpu.memory_space<vmem>>, %arg8: memref<8x128xf32, #tpu.memory_space<vmem>>, %arg9: memref<9x1x128xf32, #tpu.memory_space<vmem>>, %arg10: memref<2x64x128xf32, #tpu.memory_space<vmem>>) attributes {dimension_semantics = [#tpu.dimension_semantics<parallel>], iteration_bounds = array<i64: 4>, scalar_prefetch = 0 : i64, scratch_operands = 0 : i64, tpu.core_type = #tpu.core_type<tc>, window_params = [{transform_indices = @transform_0, window_bounds = array<i64: 2, 64, 128>}, {pipeline_mode = #tpu.pipeline_mode<synchronous>, transform_indices = @transform_1, window_bounds = array<i64: 128, 8>}, {pipeline_mode = #tpu.pipeline_mode<synchronous>, transform_indices = @transform_2, window_bounds = array<i64: 8, 128>}, {pipeline_mode = #tpu.pipeline_mode<synchronous>, transform_indices = @transform_3, window_bounds = array<i64: 8, 128>}, {pipeline_mode = #tpu.pipeline_mode<synchronous>, transform_indices = @transform_4, window_bounds = array<i64: 8, 72>}, {pipeline_mode = #tpu.pipeline_mode<synchronous>, transform_indices = @transform_5, window_bounds = array<i64: 8, 1>}, {pipeline_mode = #tpu.pipeline_mode<synchronous>, transform_indices = @transform_6, window_bounds = array<i64: 8, 1>}, {pipeline_mode = #tpu.pipeline_mode<synchronous>, transform_indices = @transform_7, window_bounds = array<i64: 8, 128>}, {pipeline_mode = #tpu.pipeline_mode<synchronous>, transform_indices = @transform_8, window_bounds = array<i64: 9, 1, 128>}, {transform_indices = @transform_9, window_bounds = array<i64: 2, 64, 128>}]} {
    %c0 = arith.constant 0 : index
    %c0_0 = arith.constant 0 : index
    %c0_1 = arith.constant 0 : index
    %0 = vector.load %arg1[%c0, %c0_0, %c0_1] : memref<2x64x128xf32, #tpu.memory_space<vmem>>, vector<2x64x128xf32>
    %cst = arith.constant dense<0.000000e+00> : vector<2x128xf32>
    %1 = vector.multi_reduction <add>, %0, %cst [1] : vector<2x64x128xf32> to vector<2x128xf32>
    %cst_2 = arith.constant 6.400000e+01 : f32
    %2 = vector.broadcast %cst_2 : f32 to vector<2x128xf32>
    %3 = arith.divf %1, %2 : vector<2x128xf32>
    %c0_3 = arith.constant 0 : index
    %c0_4 = arith.constant 0 : index
    %4 = vector.load %arg2[%c0_3, %c0_4] : memref<128x8xf32, #tpu.memory_space<vmem>>, vector<128x8xf32>
    %cst_5 = arith.constant dense<0.000000e+00> : vector<2x8xf32>
    %5 = tpu.matmul %3, %4, %cst_5 {dimension_numbers = #tpu.dot_dimension_numbers<[1], [0], [0], [1], [0, 0, 1, 1], [], []>} : vector<2x128xf32>, vector<128x8xf32>, vector<2x8xf32> -> vector<2x8xf32>
    %cst_6 = arith.constant 0.000000e+00 : f32
    %6 = vector.broadcast %cst_6 : f32 to vector<2x8xf32>
    %7 = arith.maximumf %5, %6 : vector<2x8xf32>
    %c0_7 = arith.constant 0 : index
    %c0_8 = arith.constant 0 : index
    %8 = vector.load %arg3[%c0_7, %c0_8] : memref<8x128xf32, #tpu.memory_space<vmem>>, vector<8x128xf32>
    %cst_9 = arith.constant dense<0.000000e+00> : vector<2x128xf32>
    %9 = tpu.matmul %7, %8, %cst_9 {dimension_numbers = #tpu.dot_dimension_numbers<[1], [0], [0], [1], [0, 0, 1, 1], [], []>} : vector<2x8xf32>, vector<8x128xf32>, vector<2x128xf32> -> vector<2x128xf32>
    %10 = arith.negf %9 : vector<2x128xf32>
    %11 = math.exp %10 : vector<2x128xf32>
    %cst_10 = arith.constant 1.000000e+00 : f32
    %12 = vector.broadcast %cst_10 : f32 to vector<2x128xf32>
    %13 = arith.addf %12, %11 : vector<2x128xf32>
    %14 = arith.divf %12, %13 : vector<2x128xf32>
    %15 = vector.shape_cast %14 : vector<2x128xf32> to vector<2x1x128xf32>
    %16 = vector.broadcast %15 : vector<2x1x128xf32> to vector<2x64x128xf32>
    %17 = arith.mulf %0, %16 : vector<2x64x128xf32>
    %18 = vector.shape_cast %17 : vector<2x64x128xf32> to vector<128x128xf32>
    %c0_11 = arith.constant 0 : index
    %c0_12 = arith.constant 0 : index
    %19 = vector.load %arg4[%c0_11, %c0_12] : memref<8x128xf32, #tpu.memory_space<vmem>>, vector<8x128xf32>
    %cst_13 = arith.constant dense<0.000000e+00> : vector<8x128xf32>
    %20 = tpu.matmul %19, %18, %cst_13 {dimension_numbers = #tpu.dot_dimension_numbers<[1], [1], [0], [0], [0, 0, 1, 0], [], []>} : vector<8x128xf32>, vector<128x128xf32>, vector<8x128xf32> -> vector<8x128xf32>
    %c0_14 = arith.constant 0 : index
    %c0_15 = arith.constant 0 : index
    %21 = vector.load %arg6[%c0_14, %c0_15] : memref<8x1xf32, #tpu.memory_space<vmem>>, vector<8x1xf32>
    %22 = vector.broadcast %21 : vector<8x1xf32> to vector<8x128xf32>
    %23 = arith.addf %20, %22 : vector<8x128xf32>
    %cst_16 = arith.constant 0.000000e+00 : f32
    %24 = vector.broadcast %cst_16 : f32 to vector<8x128xf32>
    %25 = arith.maximumf %23, %24 : vector<8x128xf32>
    %c9_i32 = arith.constant 9 : i32
    %26 = tpu.dynamic_rotate %25 by %c9_i32 dim 1 : vector<8x128xf32>, i32 -> vector<8x128xf32>
    %c0_17 = arith.constant 0 : index
    %c0_18 = arith.constant 0 : index
    %c0_19 = arith.constant 0 : index
    %27 = vector.load %arg9[%c0_17, %c0_18, %c0_19] : memref<9x1x128xf32, #tpu.memory_space<vmem>>, vector<1x1x128xf32>
    %28 = vector.shape_cast %27 : vector<1x1x128xf32> to vector<1x128xf32>
    %29 = vector.broadcast %28 : vector<1x128xf32> to vector<8x128xf32>
    %30 = arith.mulf %26, %29 : vector<8x128xf32>
    %c8_i32 = arith.constant 8 : i32
    %31 = tpu.dynamic_rotate %25 by %c8_i32 dim 1 : vector<8x128xf32>, i32 -> vector<8x128xf32>
    %c1 = arith.constant 1 : index
    %c0_20 = arith.constant 0 : index
    %c0_21 = arith.constant 0 : index
    %32 = vector.load %arg9[%c1, %c0_20, %c0_21] : memref<9x1x128xf32, #tpu.memory_space<vmem>>, vector<1x1x128xf32>
    %33 = vector.shape_cast %32 : vector<1x1x128xf32> to vector<1x128xf32>
    %34 = vector.broadcast %33 : vector<1x128xf32> to vector<8x128xf32>
    %35 = arith.mulf %31, %34 : vector<8x128xf32>
    %c7_i32 = arith.constant 7 : i32
    %36 = tpu.dynamic_rotate %25 by %c7_i32 dim 1 : vector<8x128xf32>, i32 -> vector<8x128xf32>
    %c2 = arith.constant 2 : index
    %c0_22 = arith.constant 0 : index
    %c0_23 = arith.constant 0 : index
    %37 = vector.load %arg9[%c2, %c0_22, %c0_23] : memref<9x1x128xf32, #tpu.memory_space<vmem>>, vector<1x1x128xf32>
    %38 = vector.shape_cast %37 : vector<1x1x128xf32> to vector<1x128xf32>
    %39 = vector.broadcast %38 : vector<1x128xf32> to vector<8x128xf32>
    %40 = arith.mulf %36, %39 : vector<8x128xf32>
    %c1_i32 = arith.constant 1 : i32
    %41 = tpu.dynamic_rotate %25 by %c1_i32 dim 1 : vector<8x128xf32>, i32 -> vector<8x128xf32>
    %c3 = arith.constant 3 : index
    %c0_24 = arith.constant 0 : index
    %c0_25 = arith.constant 0 : index
    %42 = vector.load %arg9[%c3, %c0_24, %c0_25] : memref<9x1x128xf32, #tpu.memory_space<vmem>>, vector<1x1x128xf32>
    %43 = vector.shape_cast %42 : vector<1x1x128xf32> to vector<1x128xf32>
    %44 = vector.broadcast %43 : vector<1x128xf32> to vector<8x128xf32>
    %45 = arith.mulf %41, %44 : vector<8x128xf32>
    %c127_i32 = arith.constant 127 : i32
    %46 = tpu.dynamic_rotate %25 by %c127_i32 dim 1 : vector<8x128xf32>, i32 -> vector<8x128xf32>
    %c5 = arith.constant 5 : index
    %c0_26 = arith.constant 0 : index
    %c0_27 = arith.constant 0 : index
    %47 = vector.load %arg9[%c5, %c0_26, %c0_27] : memref<9x1x128xf32, #tpu.memory_space<vmem>>, vector<1x1x128xf32>
    %48 = vector.shape_cast %47 : vector<1x1x128xf32> to vector<1x128xf32>
    %49 = vector.broadcast %48 : vector<1x128xf32> to vector<8x128xf32>
    %50 = arith.mulf %46, %49 : vector<8x128xf32>
    %c121_i32 = arith.constant 121 : i32
    %51 = tpu.dynamic_rotate %25 by %c121_i32 dim 1 : vector<8x128xf32>, i32 -> vector<8x128xf32>
    %c6 = arith.constant 6 : index
    %c0_28 = arith.constant 0 : index
    %c0_29 = arith.constant 0 : index
    %52 = vector.load %arg9[%c6, %c0_28, %c0_29] : memref<9x1x128xf32, #tpu.memory_space<vmem>>, vector<1x1x128xf32>
    %53 = vector.shape_cast %52 : vector<1x1x128xf32> to vector<1x128xf32>
    %54 = vector.broadcast %53 : vector<1x128xf32> to vector<8x128xf32>
    %55 = arith.mulf %51, %54 : vector<8x128xf32>
    %c120_i32 = arith.constant 120 : i32
    %56 = tpu.dynamic_rotate %25 by %c120_i32 dim 1 : vector<8x128xf32>, i32 -> vector<8x128xf32>
    %c7 = arith.constant 7 : index
    %c0_30 = arith.constant 0 : index
    %c0_31 = arith.constant 0 : index
    %57 = vector.load %arg9[%c7, %c0_30, %c0_31] : memref<9x1x128xf32, #tpu.memory_space<vmem>>, vector<1x1x128xf32>
    %58 = vector.shape_cast %57 : vector<1x1x128xf32> to vector<1x128xf32>
    %59 = vector.broadcast %58 : vector<1x128xf32> to vector<8x128xf32>
    %60 = arith.mulf %56, %59 : vector<8x128xf32>
    %c119_i32 = arith.constant 119 : i32
    %61 = tpu.dynamic_rotate %25 by %c119_i32 dim 1 : vector<8x128xf32>, i32 -> vector<8x128xf32>
    %c8 = arith.constant 8 : index
    %c0_32 = arith.constant 0 : index
    %c0_33 = arith.constant 0 : index
    %62 = vector.load %arg9[%c8, %c0_32, %c0_33] : memref<9x1x128xf32, #tpu.memory_space<vmem>>, vector<1x1x128xf32>
    %63 = vector.shape_cast %62 : vector<1x1x128xf32> to vector<1x128xf32>
    %64 = vector.broadcast %63 : vector<1x128xf32> to vector<8x128xf32>
    %65 = arith.mulf %61, %64 : vector<8x128xf32>
    %66 = tpu.concatenate %30, %35, %40, %45, %25, %50, %55, %60, %65 in 0 : vector<8x128xf32>, vector<8x128xf32>, vector<8x128xf32>, vector<8x128xf32>, vector<8x128xf32>, vector<8x128xf32>, vector<8x128xf32>, vector<8x128xf32>, vector<8x128xf32> -> vector<72x128xf32>
    %c0_34 = arith.constant 0 : index
    %c0_35 = arith.constant 0 : index
    %67 = vector.load %arg5[%c0_34, %c0_35] : memref<8x72xf32, #tpu.memory_space<vmem>>, vector<8x72xf32>
    %cst_36 = arith.constant dense<0.000000e+00> : vector<8x128xf32>
    %68 = tpu.matmul %67, %66, %cst_36 {dimension_numbers = #tpu.dot_dimension_numbers<[1], [0], [0], [1], [0, 0, 1, 1], [], []>} : vector<8x72xf32>, vector<72x128xf32>, vector<8x128xf32> -> vector<8x128xf32>
    %c0_37 = arith.constant 0 : index
    %c0_38 = arith.constant 0 : index
    %69 = vector.load %arg7[%c0_37, %c0_38] : memref<8x1xf32, #tpu.memory_space<vmem>>, vector<8x1xf32>
    %70 = vector.broadcast %69 : vector<8x1xf32> to vector<8x128xf32>
    %71 = arith.addf %68, %70 : vector<8x128xf32>
    %cst_39 = arith.constant 0.000000e+00 : f32
    %72 = vector.broadcast %cst_39 : f32 to vector<8x128xf32>
    %73 = arith.maximumf %71, %72 : vector<8x128xf32>
    %c0_40 = arith.constant 0 : index
    %c0_41 = arith.constant 0 : index
    %74 = vector.load %arg8[%c0_40, %c0_41] : memref<8x128xf32, #tpu.memory_space<vmem>>, vector<8x128xf32>
    %cst_42 = arith.constant dense<0.000000e+00> : vector<128x128xf32>
    %75 = tpu.matmul %73, %74, %cst_42 {dimension_numbers = #tpu.dot_dimension_numbers<[0], [0], [1], [1], [0, 1, 1, 1], [], []>} : vector<8x128xf32>, vector<8x128xf32>, vector<128x128xf32> -> vector<128x128xf32>
    %76 = vector.extract_strided_slice %75 {offsets = [0, 0], sizes = [128, 1], strides = [1, 1]} : vector<128x128xf32> to vector<128x1xf32>
    %77 = arith.negf %76 : vector<128x1xf32>
    %78 = math.exp %77 : vector<128x1xf32>
    %cst_43 = arith.constant 1.000000e+00 : f32
    %79 = vector.broadcast %cst_43 : f32 to vector<128x1xf32>
    %80 = arith.addf %79, %78 : vector<128x1xf32>
    %81 = arith.divf %79, %80 : vector<128x1xf32>
    %82 = vector.broadcast %81 : vector<128x1xf32> to vector<128x128xf32>
    %83 = arith.mulf %18, %82 : vector<128x128xf32>
    %84 = vector.shape_cast %83 : vector<128x128xf32> to vector<2x64x128xf32>
    %c0_44 = arith.constant 0 : index
    %c0_45 = arith.constant 0 : index
    %c0_46 = arith.constant 0 : index
    %85 = vector.load %arg10[%c0_44, %c0_45, %c0_46] : memref<2x64x128xf32, #tpu.memory_space<vmem>>, vector<2x64x128xf32>
    tpu.vector_store %arg10[%c0_44, %c0_45, %c0_46], %84 {strides = array<i32>} : memref<2x64x128xf32, #tpu.memory_space<vmem>>, vector<2x64x128xf32>,
    return
  }
  func.func @transform_0(%arg0: i32) -> (i32, i32, i32) {
    %c0_i32 = arith.constant 0 : i32
    %c0_i32_0 = arith.constant 0 : i32
    %c0_i32_1 = arith.constant 0 : i32
    return %arg0, %c0_i32, %c0_i32_0 : i32, i32, i32
  }
  func.func @transform_1(%arg0: i32) -> (i32, i32) {
    %c0_i32 = arith.constant 0 : i32
    %c0_i32_0 = arith.constant 0 : i32
    %c0_i32_1 = arith.constant 0 : i32
    return %c0_i32, %c0_i32_0 : i32, i32
  }
  func.func @transform_2(%arg0: i32) -> (i32, i32) {
    %c0_i32 = arith.constant 0 : i32
    %c0_i32_0 = arith.constant 0 : i32
    %c0_i32_1 = arith.constant 0 : i32
    return %c0_i32, %c0_i32_0 : i32, i32
  }
  func.func @transform_3(%arg0: i32) -> (i32, i32) {
    %c0_i32 = arith.constant 0 : i32
    %c0_i32_0 = arith.constant 0 : i32
    %c0_i32_1 = arith.constant 0 : i32
    return %c0_i32, %c0_i32_0 : i32, i32
  }
  func.func @transform_4(%arg0: i32) -> (i32, i32) {
    %c0_i32 = arith.constant 0 : i32
    %c0_i32_0 = arith.constant 0 : i32
    %c0_i32_1 = arith.constant 0 : i32
    return %c0_i32, %c0_i32_0 : i32, i32
  }
  func.func @transform_5(%arg0: i32) -> (i32, i32) {
    %c0_i32 = arith.constant 0 : i32
    %c0_i32_0 = arith.constant 0 : i32
    %c0_i32_1 = arith.constant 0 : i32
    return %c0_i32, %c0_i32_0 : i32, i32
  }
  func.func @transform_6(%arg0: i32) -> (i32, i32) {
    %c0_i32 = arith.constant 0 : i32
    %c0_i32_0 = arith.constant 0 : i32
    %c0_i32_1 = arith.constant 0 : i32
    return %c0_i32, %c0_i32_0 : i32, i32
  }
  func.func @transform_7(%arg0: i32) -> (i32, i32) {
    %c0_i32 = arith.constant 0 : i32
    %c0_i32_0 = arith.constant 0 : i32
    %c0_i32_1 = arith.constant 0 : i32
    return %c0_i32, %c0_i32_0 : i32, i32
  }
  func.func @transform_8(%arg0: i32) -> (i32, i32, i32) {
    %c0_i32 = arith.constant 0 : i32
    %c0_i32_0 = arith.constant 0 : i32
    %c0_i32_1 = arith.constant 0 : i32
    %c0_i32_2 = arith.constant 0 : i32
    return %c0_i32, %c0_i32_0, %c0_i32_1 : i32, i32, i32
  }
  func.func @transform_9(%arg0: i32) -> (i32, i32, i32) {
    %c0_i32 = arith.constant 0 : i32
    %c0_i32_0 = arith.constant 0 : i32
    %c0_i32_1 = arith.constant 0 : i32
    return %arg0, %c0_i32, %c0_i32_0 : i32, i32, i32
  }
}

</mosaic_0001>

<llo_original>
// kernel: tpu_custom_call.1
$region0: #{tpu_custom_call.1}
  #allocation0 [shape = 'u32[]', space=smem, size = 0x4, offset = 0x4, fixed_abs, tag = 'smem constant byte address 0x4 - core index']
  #allocation1 [shape = 'u32[144,128]{1,0:T(1,128)}', space=vmem, size = 0x12000, scoped, tag = 'internal scratch']
  %s0 = inlined_call_operand.hbm [shape: f32[8,64,128], index: 0, kind: input, shape index: {}]
  %s1 = inlined_call_operand.vmem [shape: f32[128,8], index: 1, kind: input, shape index: {}]
  %s2 = inlined_call_operand.vmem [shape: f32[8,128], index: 2, kind: input, shape index: {}]
  %s3 = inlined_call_operand.vmem [shape: f32[8,128], index: 3, kind: input, shape index: {}]
  %s4 = inlined_call_operand.vmem [shape: f32[8,72], index: 4, kind: input, shape index: {}]
  %s5 = inlined_call_operand.vmem [shape: f32[8,1], index: 5, kind: input, shape index: {}]
  %s6 = inlined_call_operand.vmem [shape: f32[8,1], index: 6, kind: input, shape index: {}]
  %s7 = inlined_call_operand.vmem [shape: f32[8,128], index: 7, kind: input, shape index: {}]
  %s8 = inlined_call_operand.vmem [shape: f32[9,1,128], index: 8, kind: input, shape index: {}]
  %s9 = inlined_call_operand.hbm [shape: f32[8,64,128], index: 9, kind: output, shape index: {}]
  %s10 = sld [smem:[#allocation0]]
  $region73: #{tpu_custom_call.1} parent=0
    _
  %s12 = ssub.s32 1, %s10
  %s13 = scalar_select 0, %s12, %s10
  $region1: #{tpu_custom_call.1} parent=0
    #allocation2 [shape = 'u8[131072]{0}', space=vmem, size = 0x20000, scoped, tag = 'input window, operand 0']
    #allocation3 [shape = 's32[2]{0}', space=sflag, size = 0x8, scoped, tag = 'scoped memory for tpu_custom_call.1']
    #allocation4 [shape = 's32[2]{0}', space=sflag, size = 0x8, scoped, tag = 'scoped memory for tpu_custom_call.1']
    #allocation5 [shape = 'u8[131072]{0}', space=vmem, size = 0x20000, scoped, tag = 'output window, operand 0']
    %14 = vsyncpa [#allocation3], 0
    %s15 = scalar_lea.sflag [#allocation3], 1
    %16 = vsyncpa %s15, 0
    %17 = vsyncpa [#allocation4], 0
    %s18 = scalar_lea.sflag [#allocation4], 1
    %19 = vsyncpa %s18, 0
    loop: start=0, step=1, limit=6
    $region2: #{tpu_custom_call.1} parent=1 // loop_pre_header
      _
    $region3: #{tpu_custom_call.1} parent=1 // loop_header
      %s21 = sphi 0, %s25
      %p22 = scmp.ge.s32.totalorder %s21, 6
      %s31 = sphi 0, %s33
      %s34 = sphi 0, %s31
      %s35 = sphi 0, %s34
      %s51 = sphi 0, %s35
      %s55 = sphi 0, %s55
      %s57 = sphi 0, %s55
      %s58 = sphi 0, %s57
      %s72 = sphi 0, %s58
      %s76 = sphi 0, %s76
      %s78 = sphi 0, %s76
      %s79 = sphi 0, %s78
      %s93 = sphi 0, %s79
      %s97 = sphi 0, %s97
      %s99 = sphi 0, %s97
      %s100 = sphi 0, %s99
      %s114 = sphi 0, %s100
      %s118 = sphi 0, %s118
      %s120 = sphi 0, %s118
      %s121 = sphi 0, %s120
      %s135 = sphi 0, %s121
      %s139 = sphi 0, %s139
      %s141 = sphi 0, %s139
      %s142 = sphi 0, %s141
      %s156 = sphi 0, %s142
      %s160 = sphi 0, %s160
      %s162 = sphi 0, %s160
      %s163 = sphi 0, %s162
      %s177 = sphi 0, %s163
      %s181 = sphi 0, %s181
      %s183 = sphi 0, %s181
      %s184 = sphi 0, %s183
      %s198 = sphi 0, %s184
      %s202 = sphi 0, %s202
      %s204 = sphi 0, %s202
      %s205 = sphi 0, %s204
      %s219 = sphi 0, %s205
      %s225 = sphi 0, %s227
      %s228 = sphi 0, %s225
      %s229 = sphi 0, %s228
      %s245 = sphi 0, %s229
    $region4: #{tpu_custom_call.1} parent=1 // loop_header_branch
      %24 = sbr.rel (%p22) target = $region8
    $region5: #{tpu_custom_call.1} parent=1 // loop_body
      %s26 = ssub.s32 %s21, 1
      %s27 = ssub.s32 %s21, 2
      %s28 = sadd.s32 %s21, 1
      %s29 = ssub.s32 %s21, %s28
      %p30 = scmp.eq.s32.totalorder %s29, 0
      %s32 = sadd.s32 %s31, 1
      %s33 = scalar_select %p30, %s31, %s32
      %p36 = pneg %p30
      %p37 = scmp.eq.s32.totalorder %s21, 3
      %p38 = por %p36, %p37
      %p39 = scmp.ne.s32.totalorder %s31, %s34
      %p40 = scmp.eq.s32.totalorder %s21, 0
      %p41 = por %p39, %p40
      %p42 = scmp.ne.s32.totalorder %s31, %s34
      %p43 = scmp.eq.s32.totalorder %s26, 3
      %p44 = por %p42, %p43
      %p45 = scmp.ne.s32.totalorder %s34, %s35
      %p46 = scmp.eq.s32.totalorder %s26, 0
      %p47 = por %p45, %p46
      %p48 = scmp.ne.s32.totalorder %s34, %s35
      %p49 = scmp.eq.s32.totalorder %s27, 3
      %p50 = por %p48, %p49
      %p52 = scmp.ne.s32.totalorder %s35, %s51
      %p53 = scmp.eq.s32.totalorder %s27, 0
      %p54 = por %p52, %p53
      %s56 = sadd.s32 %s55, 1
      %p59 = scmp.eq.s32.totalorder %s21, 3
      %p60 = scmp.ne.s32.totalorder %s55, %s57
      %p61 = scmp.eq.s32.totalorder %s21, 0
      %p62 = por %p60, %p61
      %p63 = scmp.ne.s32.totalorder %s55, %s57
      %p64 = scmp.eq.s32.totalorder %s26, 3
      %p65 = por %p63, %p64
      %p66 = scmp.ne.s32.totalorder %s57, %s58
      %p67 = scmp.eq.s32.totalorder %s26, 0
      %p68 = por %p66, %p67
      %p69 = scmp.ne.s32.totalorder %s57, %s58
      %p70 = scmp.eq.s32.totalorder %s27, 3
      %p71 = por %p69, %p70
      %p73 = scmp.ne.s32.totalorder %s58, %s72
      %p74 = scmp.eq.s32.totalorder %s27, 0
      %p75 = por %p73, %p74
      %s77 = sadd.s32 %s76, 1
      %p80 = scmp.eq.s32.totalorder %s21, 3
      %p81 = scmp.ne.s32.totalorder %s76, %s78
      %p82 = scmp.eq.s32.totalorder %s21, 0
      %p83 = por %p81, %p82
      %p84 = scmp.ne.s32.totalorder %s76, %s78
      %p85 = scmp.eq.s32.totalorder %s26, 3
      %p86 = por %p84, %p85
      %p87 = scmp.ne.s32.totalorder %s78, %s79
      %p88 = scmp.eq.s32.totalorder %s26, 0
      %p89 = por %p87, %p88
      %p90 = scmp.ne.s32.totalorder %s78, %s79
      %p91 = scmp.eq.s32.totalorder %s27, 3
      %p92 = por %p90, %p91
      %p94 = scmp.ne.s32.totalorder %s79, %s93
      %p95 = scmp.eq.s32.totalorder %s27, 0
      %p96 = por %p94, %p95
      %s98 = sadd.s32 %s97, 1
      %p101 = scmp.eq.s32.totalorder %s21, 3
      %p102 = scmp.ne.s32.totalorder %s97, %s99
      %p103 = scmp.eq.s32.totalorder %s21, 0
      %p104 = por %p102, %p103
      %p105 = scmp.ne.s32.totalorder %s97, %s99
      %p106 = scmp.eq.s32.totalorder %s26, 3
      %p107 = por %p105, %p106
      %p108 = scmp.ne.s32.totalorder %s99, %s100
      %p109 = scmp.eq.s32.totalorder %s26, 0
      %p110 = por %p108, %p109
      %p111 = scmp.ne.s32.totalorder %s99, %s100
      %p112 = scmp.eq.s32.totalorder %s27, 3
      %p113 = por %p111, %p112
      %p115 = scmp.ne.s32.totalorder %s100, %s114
      %p116 = scmp.eq.s32.totalorder %s27, 0
      %p117 = por %p115, %p116
      %s119 = sadd.s32 %s118, 1
      %p122 = scmp.eq.s32.totalorder %s21, 3
      %p123 = scmp.ne.s32.totalorder %s118, %s120
      %p124 = scmp.eq.s32.totalorder %s21, 0
      %p125 = por %p123, %p124
      %p126 = scmp.ne.s32.totalorder %s118, %s120
      %p127 = scmp.eq.s32.totalorder %s26, 3
      %p128 = por %p126, %p127
      %p129 = scmp.ne.s32.totalorder %s120, %s121
      %p130 = scmp.eq.s32.totalorder %s26, 0
      %p131 = por %p129, %p130
      %p132 = scmp.ne.s32.totalorder %s120, %s121
      %p133 = scmp.eq.s32.totalorder %s27, 3
      %p134 = por %p132, %p133
      %p136 = scmp.ne.s32.totalorder %s121, %s135
      %p137 = scmp.eq.s32.totalorder %s27, 0
      %p138 = por %p136, %p137
      %s140 = sadd.s32 %s139, 1
      %p143 = scmp.eq.s32.totalorder %s21, 3
      %p144 = scmp.ne.s32.totalorder %s139, %s141
      %p145 = scmp.eq.s32.totalorder %s21, 0
      %p146 = por %p144, %p145
      %p147 = scmp.ne.s32.totalorder %s139, %s141
      %p148 = scmp.eq.s32.totalorder %s26, 3
      %p149 = por %p147, %p148
      %p150 = scmp.ne.s32.totalorder %s141, %s142
      %p151 = scmp.eq.s32.totalorder %s26, 0
      %p152 = por %p150, %p151
      %p153 = scmp.ne.s32.totalorder %s141, %s142
      %p154 = scmp.eq.s32.totalorder %s27, 3
      %p155 = por %p153, %p154
      %p157 = scmp.ne.s32.totalorder %s142, %s156
      %p158 = scmp.eq.s32.totalorder %s27, 0
      %p159 = por %p157, %p158
      %s161 = sadd.s32 %s160, 1
      %p164 = scmp.eq.s32.totalorder %s21, 3
      %p165 = scmp.ne.s32.totalorder %s160, %s162
      %p166 = scmp.eq.s32.totalorder %s21, 0
      %p167 = por %p165, %p166
      %p168 = scmp.ne.s32.totalorder %s160, %s162
      %p169 = scmp.eq.s32.totalorder %s26, 3
      %p170 = por %p168, %p169
      %p171 = scmp.ne.s32.totalorder %s162, %s163
      %p172 = scmp.eq.s32.totalorder %s26, 0
      %p173 = por %p171, %p172
      %p174 = scmp.ne.s32.totalorder %s162, %s163
      %p175 = scmp.eq.s32.totalorder %s27, 3
      %p176 = por %p174, %p175
      %p178 = scmp.ne.s32.totalorder %s163, %s177
      %p179 = scmp.eq.s32.totalorder %s27, 0
      %p180 = por %p178, %p179
      %s182 = sadd.s32 %s181, 1
      %p185 = scmp.eq.s32.totalorder %s21, 3
      %p186 = scmp.ne.s32.totalorder %s181, %s183
      %p187 = scmp.eq.s32.totalorder %s21, 0
      %p188 = por %p186, %p187
      %p189 = scmp.ne.s32.totalorder %s181, %s183
      %p190 = scmp.eq.s32.totalorder %s26, 3
      %p191 = por %p189, %p190
      %p192 = scmp.ne.s32.totalorder %s183, %s184
      %p193 = scmp.eq.s32.totalorder %s26, 0
      %p194 = por %p192, %p193
      %p195 = scmp.ne.s32.totalorder %s183, %s184
      %p196 = scmp.eq.s32.totalorder %s27, 3
      %p197 = por %p195, %p196
      %p199 = scmp.ne.s32.totalorder %s184, %s198
      %p200 = scmp.eq.s32.totalorder %s27, 0
      %p201 = por %p199, %p200
      %s203 = sadd.s32 %s202, 1
      %p206 = scmp.eq.s32.totalorder %s21, 3
      %p207 = scmp.ne.s32.totalorder %s202, %s204
      %p208 = scmp.eq.s32.totalorder %s21, 0
      %p209 = por %p207, %p208
      %p210 = scmp.ne.s32.totalorder %s202, %s204
      %p211 = scmp.eq.s32.totalorder %s26, 3
      %p212 = por %p210, %p211
      %p213 = scmp.ne.s32.totalorder %s204, %s205
      %p214 = scmp.eq.s32.totalorder %s26, 0
      %p215 = por %p213, %p214
      %p216 = scmp.ne.s32.totalorder %s204, %s205
      %p217 = scmp.eq.s32.totalorder %s27, 3
      %p218 = por %p216, %p217
      %p220 = scmp.ne.s32.totalorder %s205, %s219
      %p221 = scmp.eq.s32.totalorder %s27, 0
      %p222 = por %p220, %p221
      %s223 = ssub.s32 %s21, %s28
      %p224 = scmp.eq.s32.totalorder %s223, 0
      %s226 = sadd.s32 %s225, 1
      %s227 = scalar_select %p224, %s225, %s226
      %p230 = pneg %p224
      %p231 = scmp.eq.s32.totalorder %s21, 3
      %p232 = por %p230, %p231
      %p233 = scmp.ne.s32.totalorder %s225, %s228
      %p234 = scmp.eq.s32.totalorder %s21, 0
      %p235 = por %p233, %p234
      %p236 = scmp.ne.s32.totalorder %s225, %s228
      %p237 = scmp.eq.s32.totalorder %s26, 3
      %p238 = por %p236, %p237
      %p239 = scmp.ne.s32.totalorder %s228, %s229
      %p240 = scmp.eq.s32.totalorder %s26, 0
      %p241 = por %p239, %p240
      %p242 = scmp.ne.s32.totalorder %s228, %s229
      %p243 = scmp.eq.s32.totalorder %s27, 3
      %p244 = por %p242, %p243
      %p246 = scmp.ne.s32.totalorder %s229, %s245
      %p247 = scmp.eq.s32.totalorder %s27, 0
      %p248 = por %p246, %p247
      %p249 = scmp.le.s32.totalorder 1, %s21
      %p250 = scmp.lt.s32.totalorder %s21, 5
      %p251 = pnand %p249, %p250
      %p252 = pneg %p251
      // Predicated region
      $region9: #{tpu_custom_call.1} parent=5 // pred_check
        _
      $region10: #{tpu_custom_call.1} parent=5 // pred_check_branch
        %254 = sbr.rel (%p251) target = $region12
      $region11: #{tpu_custom_call.1} parent=5 // pred_region
        %s255 = ssub.s32 %s21, 1
        // Predicated region
        $region13: #{tpu_custom_call.1} parent=11 // pred_check
          %p256 = pneg %p68
        $region14: #{tpu_custom_call.1} parent=11 // pred_check_branch
          %258 = sbr.rel (%p256) target = $region16
        $region15: #{tpu_custom_call.1} parent=11 // pred_region
          _
        $region16: #{tpu_custom_call.1} parent=11 // pred_fallthru
          _
        // Predicated region
        $region17: #{tpu_custom_call.1} parent=11 // pred_check
          %p259 = pneg %p89
        $region18: #{tpu_custom_call.1} parent=11 // pred_check_branch
          %261 = sbr.rel (%p259) target = $region20
        $region19: #{tpu_custom_call.1} parent=11 // pred_region
          _
        $region20: #{tpu_custom_call.1} parent=11 // pred_fallthru
          _
        // Predicated region
        $region21: #{tpu_custom_call.1} parent=11 // pred_check
          %p262 = pneg %p110
        $region22: #{tpu_custom_call.1} parent=11 // pred_check_branch
          %264 = sbr.rel (%p262) target = $region24
        $region23: #{tpu_custom_call.1} parent=11 // pred_region
          _
        $region24: #{tpu_custom_call.1} parent=11 // pred_fallthru
          _
        // Predicated region
        $region25: #{tpu_custom_call.1} parent=11 // pred_check
          %p265 = pneg %p131
        $region26: #{tpu_custom_call.1} parent=11 // pred_check_branch
          %267 = sbr.rel (%p265) target = $region28
        $region27: #{tpu_custom_call.1} parent=11 // pred_region
          _
        $region28: #{tpu_custom_call.1} parent=11 // pred_fallthru
          _
        // Predicated region
        $region29: #{tpu_custom_call.1} parent=11 // pred_check
          %p268 = pneg %p152
        $region30: #{tpu_custom_call.1} parent=11 // pred_check_branch
          %270 = sbr.rel (%p268) target = $region32
        $region31: #{tpu_custom_call.1} parent=11 // pred_region
          _
        $region32: #{tpu_custom_call.1} parent=11 // pred_fallthru
          _
        // Predicated region
        $region33: #{tpu_custom_call.1} parent=11 // pred_check
          %p271 = pneg %p173
        $region34: #{tpu_custom_call.1} parent=11 // pred_check_branch
          %273 = sbr.rel (%p271) target = $region36
        $region35: #{tpu_custom_call.1} parent=11 // pred_region
          _
        $region36: #{tpu_custom_call.1} parent=11 // pred_fallthru
          _
        // Predicated region
        $region37: #{tpu_custom_call.1} parent=11 // pred_check
          %p274 = pneg %p194
        $region38: #{tpu_custom_call.1} parent=11 // pred_check_branch
          %276 = sbr.rel (%p274) target = $region40
        $region39: #{tpu_custom_call.1} parent=11 // pred_region
          _
        $region40: #{tpu_custom_call.1} parent=11 // pred_fallthru
          _
        // Predicated region
        $region41: #{tpu_custom_call.1} parent=11 // pred_check
          %p277 = pneg %p215
        $region42: #{tpu_custom_call.1} parent=11 // pred_check_branch
          %279 = sbr.rel (%p277) target = $region44
        $region43: #{tpu_custom_call.1} parent=11 // pred_region
          _
        $region44: #{tpu_custom_call.1} parent=11 // pred_fallthru
          _
      $region12: #{tpu_custom_call.1} parent=5 // pred_fallthru
        _
      %p280 = scmp.lt.s32.totalorder %s21, 4
      // Predicated region
      $region45: #{tpu_custom_call.1} parent=5 // pred_check
        %p281 = pneg %p280
      $region46: #{tpu_custom_call.1} parent=5 // pred_check_branch
        %283 = sbr.rel (%p281) target = $region48
      $region47: #{tpu_custom_call.1} parent=5 // pred_region
        // Predicated region
        $region49: #{tpu_custom_call.1} parent=47 // pred_check
          %p284 = pneg %p41
        $region50: #{tpu_custom_call.1} parent=47 // pred_check_branch
          %286 = sbr.rel (%p284) target = $region52
        $region51: #{tpu_custom_call.1} parent=47 // pred_region
          %s287 = sand.u32 %s31, 1
          %s288 = scalar_lea.sflag [#allocation3], %s287
          %s289 = sand.u32 %s31, 1
          %s290 = smul.addr %s289, 128
          %s291 = scalar_lea.vmem [#allocation2], %s290
          %s292 = smul.u32 2, %s21
          %s294 = ssub.s32 2048, 2048
          %295 = vsyncadd %s288, %s294
          %s296 = smul.addr %s292, 8
          %s297 = smul.addr %s296, 128
          %s298 = scalar_lea.hbm %s0, %s297
          %s299 = sshll.u32 %s291, 4
          %s300 = int_to_ptr.vmem [resolvable:$true] %s299
          %305 = dma.hbm_to_vmem [thread:$0]  %s298, 2048, %s300, %s288, 128, 128, 8
        $region52: #{tpu_custom_call.1} parent=47 // pred_fallthru
          _
      $region48: #{tpu_custom_call.1} parent=5 // pred_fallthru
        _
      %p306 = scmp.le.s32.totalorder 1, %s21
      %p307 = scmp.lt.s32.totalorder %s21, 5
      %p308 = pnand %p306, %p307
      %p309 = pneg %p308
      // Predicated region
      $region53: #{tpu_custom_call.1} parent=5 // pred_check
        _
      $region54: #{tpu_custom_call.1} parent=5 // pred_check_branch
        %311 = sbr.rel (%p308) target = $region56
      $region55: #{tpu_custom_call.1} parent=5 // pred_region
        %s312 = ssub.s32 %s21, 1
        %s313 = sand.u32 %s34, 1
        %s314 = scalar_lea.sflag [#allocation3], %s313
        %s315 = sand.u32 %s34, 1
        %s316 = smul.addr %s315, 128
        %s317 = scalar_lea.vmem [#allocation2], %s316
        // Predicated region
        $region57: #{tpu_custom_call.1} parent=55 // pred_check
          %p318 = pneg %p47
        $region58: #{tpu_custom_call.1} parent=55 // pred_check_branch
          %320 = sbr.rel (%p318) target = $region60
        $region59: #{tpu_custom_call.1} parent=55 // pred_region
          %321 = dma.done %s314, 2048
        $region60: #{tpu_custom_call.1} parent=55 // pred_fallthru
          _
        %s322 = sand.u32 %s34, 1
        %s323 = scalar_lea.sflag [#allocation3], %s322
        %s324 = sand.u32 %s34, 1
        %s325 = smul.addr %s324, 128
        %s326 = scalar_lea.vmem [#allocation2], %s325
        %p327 = pneg %p47
        %p328 = pneg %p44
        %p329 = pneg %p68
        %p330 = pneg %p65
        %p331 = pneg %p89
        %p332 = pneg %p86
        %p333 = pneg %p110
        %p334 = pneg %p107
        %p335 = pneg %p131
        %p336 = pneg %p128
        %p337 = pneg %p152
        %p338 = pneg %p149
        %p339 = pneg %p173
        %p340 = pneg %p170
        %p341 = pneg %p194
        %p342 = pneg %p191
        %p343 = pneg %p215
        %p344 = pneg %p212
        %p345 = pneg %p241
        %p346 = pneg %p238
        %s347 = sand.u32 %s228, 1
        %s348 = scalar_lea.sflag [#allocation4], %s347
        %s349 = sand.u32 %s228, 1
        %s350 = smul.addr %s349, 128
        %s351 = scalar_lea.vmem [#allocation5], %s350
        %s352 = smul.u32 2, %s26
        %s353 = smul.u32 2, %s26
        %v354 = vld [vmem:[%s317] sm:$0xff]
        %v355 = vld [vmem:[%s317 + $0x8] sm:$0xff]
        %v356 = vld [vmem:[%s317 + $0x10] sm:$0xff]
        %v357 = vld [vmem:[%s317 + $0x18] sm:$0xff]
        %v358 = vld [vmem:[%s317 + $0x20] sm:$0xff]
        %v359 = vld [vmem:[%s317 + $0x28] sm:$0xff]
        %v360 = vld [vmem:[%s317 + $0x30] sm:$0xff]
        %v361 = vld [vmem:[%s317 + $0x38] sm:$0xff]
        %v362 = vld [vmem:[%s317 + $0x40] sm:$0xff]
        %v363 = vld [vmem:[%s317 + $0x48] sm:$0xff]
        %v364 = vld [vmem:[%s317 + $0x50] sm:$0xff]
        %v365 = vld [vmem:[%s317 + $0x58] sm:$0xff]
        %v366 = vld [vmem:[%s317 + $0x60] sm:$0xff]
        %v367 = vld [vmem:[%s317 + $0x68] sm:$0xff]
        %v368 = vld [vmem:[%s317 + $0x70] sm:$0xff]
        %v369 = vld [vmem:[%s317 + $0x78] sm:$0xff]
        %v370 = vadd.f32 %v354, %v355
        %v371 = vadd.f32 %v370, %v356
        %v372 = vadd.f32 %v371, %v357
        %v373 = vadd.f32 %v372, %v358
        %v374 = vadd.f32 %v373, %v359
        %v375 = vadd.f32 %v374, %v360
        %v376 = vadd.f32 %v375, %v361
        %v377 = vrot.slane %v376, 4
        %v378 = vadd.f32 %v376, %v377
        %v379 = vrot.slane %v378, 2
        %v380 = vadd.f32 %v378, %v379
        %v381 = vrot.slane %v380, 1
        %v382 = vadd.f32 %v380, %v381
        %v383 = vadd.f32 %v362, %v363
        %v384 = vadd.f32 %v383, %v364
        %v385 = vadd.f32 %v384, %v365
        %v386 = vadd.f32 %v385, %v366
        %v387 = vadd.f32 %v386, %v367
        %v388 = vadd.f32 %v387, %v368
        %v389 = vadd.f32 %v388, %v369
        %v390 = vrot.slane %v389, 4
        %v391 = vadd.f32 %v389, %v390
        %v392 = vrot.slane %v391, 2
        %v393 = vadd.f32 %v391, %v392
        %v394 = vrot.slane %v393, 1
        %v395 = vadd.f32 %v393, %v394
        %v396 = vrcp.pop 64.0
        %v397 = vmul.f32 %v382, %v396
        %v398 = vmul.f32 %v395, %v396
        %v399 = vld [vmem:[%s1] sm:$0xff]
        %v400 = vld [vmem:[%s1 + $0x8] sm:$0xff]
        %v401 = vld [vmem:[%s1 + $0x10] sm:$0xff]
        %v402 = vld [vmem:[%s1 + $0x18] sm:$0xff]
        %v403 = vld [vmem:[%s1 + $0x20] sm:$0xff]
        %v404 = vld [vmem:[%s1 + $0x28] sm:$0xff]
        %v405 = vld [vmem:[%s1 + $0x30] sm:$0xff]
        %v406 = vld [vmem:[%s1 + $0x38] sm:$0xff]
        %v407 = vld [vmem:[%s1 + $0x40] sm:$0xff]
        %v408 = vld [vmem:[%s1 + $0x48] sm:$0xff]
        %v409 = vld [vmem:[%s1 + $0x50] sm:$0xff]
        %v410 = vld [vmem:[%s1 + $0x58] sm:$0xff]
        %v411 = vld [vmem:[%s1 + $0x60] sm:$0xff]
        %v412 = vld [vmem:[%s1 + $0x68] sm:$0xff]
        %v413 = vld [vmem:[%s1 + $0x70] sm:$0xff]
        %v414 = vld [vmem:[%s1 + $0x78] sm:$0xff]
        %vm417 = vcmask 1041409
        %v418 = vsel %vm417, %v398, %v397
        %420 = vmatprep.subr.mxu0 0.0
        %421 = vmatpush1.msra.mxu0 %v399
        %422 = vmatprep.subr.mxu0 0.0
        %423 = vmatpush1.msra.mxu0 %v400
        %424 = vmatprep.subr.mxu0 0.0
        %425 = vmatpush1.msra.mxu0 %v401
        %426 = vmatprep.subr.mxu0 0.0
        %427 = vmatpush1.msra.mxu0 %v402
        %428 = vmatprep.subr.mxu0 0.0
        %429 = vmatpush1.msra.mxu0 %v403
        %430 = vmatprep.subr.mxu0 0.0
        %431 = vmatpush1.msra.mxu0 %v404
        %432 = vmatprep.subr.mxu0 0.0
        %433 = vmatpush1.msra.mxu0 %v405
        %434 = vmatprep.subr.mxu0 0.0
        %435 = vmatpush1.msra.mxu0 %v406
        %436 = vmatprep.subr.mxu0 0.0
        %437 = vmatpush1.msra.mxu0 %v407
        %438 = vmatprep.subr.mxu0 0.0
        %439 = vmatpush1.msra.mxu0 %v408
        %440 = vmatprep.subr.mxu0 0.0
        %441 = vmatpush1.msra.mxu0 %v409
        %442 = vmatprep.subr.mxu0 0.0
        %443 = vmatpush1.msra.mxu0 %v410
        %444 = vmatprep.subr.mxu0 0.0
        %445 = vmatpush1.msra.mxu0 %v411
        %446 = vmatprep.subr.mxu0 0.0
        %447 = vmatpush1.msra.mxu0 %v412
        %448 = vmatprep.subr.mxu0 0.0
        %449 = vmatpush1.msra.mxu0 %v413
        %450 = vmatprep.subr.mxu0 0.0
        %451 = vmatpush1.msra.mxu0 %v414
        %452 = vmatprep.subr.mxu0 0.0
        %453 = vmatpush1.msra.mxu0 0.0
        %454 = vmatprep.subr.mxu0 0.0
        %455 = vmatpush1.msra.mxu0 0.0
        %456 = vmatprep.subr.mxu0 0.0
        %457 = vmatpush1.msra.mxu0 0.0
        %458 = vmatprep.subr.mxu0 0.0
        %459 = vmatpush1.msra.mxu0 0.0
        %460 = vmatprep.subr.mxu0 0.0
        %461 = vmatpush1.msra.mxu0 0.0
        %462 = vmatprep.subr.mxu0 0.0
        %463 = vmatpush1.msra.mxu0 0.0
        %464 = vmatprep.subr.mxu0 0.0
        %465 = vmatpush1.msra.mxu0 0.0
        %466 = vmatprep.subr.mxu0 0.0
        %467 = vmatpush1.msra.mxu0 0.0
        %468 = vmatprep.subr.mxu0 0.0
        %469 = vmatpush1.msra.mxu0 0.0
        %470 = vmatprep.subr.mxu0 0.0
        %471 = vmatpush1.msra.mxu0 0.0
        %472 = vmatprep.subr.mxu0 0.0
        %473 = vmatpush1.msra.mxu0 0.0
        %474 = vmatprep.subr.mxu0 0.0
        %475 = vmatpush1.msra.mxu0 0.0
        %476 = vmatprep.subr.mxu0 0.0
        %477 = vmatpush1.msra.mxu0 0.0
        %478 = vmatprep.subr.mxu0 0.0
        %479 = vmatpush1.msra.mxu0 0.0
        %480 = vmatprep.subr.mxu0 0.0
        %481 = vmatpush1.msra.mxu0 0.0
        %482 = vmatprep.subr.mxu0 0.0
        %483 = vmatpush1.msra.mxu0 0.0
        %484 = vmatprep.mubr.f32.mxu0 0.0
        %485 = vmatmul.mubr.f32.gmra.mrb[0].mxu0 %v418
        %v486 = vpop.f32.mrb[0].mxu0
        %v487 = vadd.f32 0.0, %v486
        %v488 = vpop.f32.mrb[0].mxu0
        %489 = vdwg.mxu0
        %v490 = vmax.f32 %v487, 0.0
        %v491 = vld [vmem:[%s2] sm:$0xff]
        %vm492 = vcmask 64512
        %v494 = vsel %vm492, %v490, 0
        %496 = vmatprep.subr.mxu0 0.0
        %497 = vmatpush1.msra.mxu0 %v491
        %498 = vmatprep.subr.mxu0 0.0
        %499 = vmatpush1.msra.mxu0 0.0
        %500 = vmatprep.subr.mxu0 0.0
        %501 = vmatpush1.msra.mxu0 0.0
        %502 = vmatprep.subr.mxu0 0.0
        %503 = vmatpush1.msra.mxu0 0.0
        %504 = vmatprep.subr.mxu0 0.0
        %505 = vmatpush1.msra.mxu0 0.0
        %506 = vmatprep.subr.mxu0 0.0
        %507 = vmatpush1.msra.mxu0 0.0
        %508 = vmatprep.subr.mxu0 0.0
        %509 = vmatpush1.msra.mxu0 0.0
        %510 = vmatprep.subr.mxu0 0.0
        %511 = vmatpush1.msra.mxu0 0.0
        %512 = vmatprep.subr.mxu0 0.0
        %513 = vmatpush1.msra.mxu0 0.0
        %514 = vmatprep.subr.mxu0 0.0
        %515 = vmatpush1.msra.mxu0 0.0
        %516 = vmatprep.subr.mxu0 0.0
        %517 = vmatpush1.msra.mxu0 0.0
        %518 = vmatprep.subr.mxu0 0.0
        %519 = vmatpush1.msra.mxu0 0.0
        %520 = vmatprep.subr.mxu0 0.0
        %521 = vmatpush1.msra.mxu0 0.0
        %522 = vmatprep.subr.mxu0 0.0
        %523 = vmatpush1.msra.mxu0 0.0
        %524 = vmatprep.subr.mxu0 0.0
        %525 = vmatpush1.msra.mxu0 0.0
        %526 = vmatprep.subr.mxu0 0.0
        %527 = vmatpush1.msra.mxu0 0.0
        %528 = vmatprep.subr.mxu0 0.0
        %529 = vmatpush1.msra.mxu0 0.0
        %530 = vmatprep.subr.mxu0 0.0
        %531 = vmatpush1.msra.mxu0 0.0
        %532 = vmatprep.subr.mxu0 0.0
        %533 = vmatpush1.msra.mxu0 0.0
        %534 = vmatprep.subr.mxu0 0.0
        %535 = vmatpush1.msra.mxu0 0.0
        %536 = vmatprep.subr.mxu0 0.0
        %537 = vmatpush1.msra.mxu0 0.0
        %538 = vmatprep.subr.mxu0 0.0
        %539 = vmatpush1.msra.mxu0 0.0
        %540 = vmatprep.subr.mxu0 0.0
        %541 = vmatpush1.msra.mxu0 0.0
        %542 = vmatprep.subr.mxu0 0.0
        %543 = vmatpush1.msra.mxu0 0.0
        %544 = vmatprep.subr.mxu0 0.0
        %545 = vmatpush1.msra.mxu0 0.0
        %546 = vmatprep.subr.mxu0 0.0
        %547 = vmatpush1.msra.mxu0 0.0
        %548 = vmatprep.subr.mxu0 0.0
        %549 = vmatpush1.msra.mxu0 0.0
        %550 = vmatprep.subr.mxu0 0.0
        %551 = vmatpush1.msra.mxu0 0.0
        %552 = vmatprep.subr.mxu0 0.0
        %553 = vmatpush1.msra.mxu0 0.0
        %554 = vmatprep.subr.mxu0 0.0
        %555 = vmatpush1.msra.mxu0 0.0
        %556 = vmatprep.subr.mxu0 0.0
        %557 = vmatpush1.msra.mxu0 0.0
        %558 = vmatprep.subr.mxu0 0.0
        %559 = vmatpush1.msra.mxu0 0.0
        %560 = vmatprep.mubr.f32.mxu0 0.0
        %561 = vmatmul.mubr.f32.gmra.mrb[0].mxu0 %v494
        %v562 = vpop.f32.mrb[0].mxu0
        %v563 = vadd.f32 0.0, %v562
        %v564 = vpop.f32.mrb[0].mxu0
        %565 = vdwg.mxu0
        %v566 = vxor.u32 %v563, 2147483648
        %v567 = vmul.f32 %v566, 1.442695
        %v568 = vpow.pop %v567
        %v569 = vadd.f32 %v568, 1.0
        %v570 = vrcp.pop %v569
        %v571 = vmul.f32 1.0, %v570
        %v574 = vunpack.c.l.s4 1966171168
        %v575 = vunpack.c.0.s8 %v574
        %v576 = vlaneseq
        %v577 = vshrl.u32 %v576, 7
        %v578 = vsub.s32 %v575, %v577
        %v579 = vrot.slane %v571, %v578
        %v580 = vcombine.high %v579, %v579
        %v582 = vunpack.c.l.s4 1966171168
        %v583 = vunpack.c.0.s8 %v582
        %v584 = vlaneseq
        %v585 = vshrl.u32 %v584, 7
        %v586 = vsub.s32 %v583, %v585
        %v587 = vrot.slane %v579, %v586
        %v589 = vunpack.c.l.s4 1966171168
        %v590 = vunpack.c.0.s8 %v589
        %v591 = vlaneseq
        %v592 = vshrl.u32 %v591, 7
        %v593 = vsub.s32 %v590, %v592
        %v594 = vrot.slane %v580, %v593
        %v595 = vlaneseq
        %v596 = vshrl.u32 %v595, 7
        %v597 = vsub.s32 0, %v596
        %v598 = vrot.slane %v587, %v597
        %v599 = vlaneseq
        %v600 = vshrl.u32 %v599, 7
        %v601 = vsub.s32 0, %v600
        %v602 = vrot.slane %v594, %v601
        %v605 = vmul.f32 %v354, %v598
        %v606 = vmul.f32 %v355, %v598
        %v607 = vmul.f32 %v356, %v598
        %v608 = vmul.f32 %v357, %v598
        %v609 = vmul.f32 %v358, %v598
        %v610 = vmul.f32 %v359, %v598
        %v611 = vmul.f32 %v360, %v598
        %v612 = vmul.f32 %v361, %v598
        %v613 = vmul.f32 %v362, %v602
        %v614 = vmul.f32 %v363, %v602
        %v615 = vmul.f32 %v364, %v602
        %v616 = vmul.f32 %v365, %v602
        %v617 = vmul.f32 %v366, %v602
        %v618 = vmul.f32 %v367, %v602
        %v619 = vmul.f32 %v368, %v602
        %v620 = vmul.f32 %v369, %v602
        %v621 = vld [vmem:[%s3] sm:$0xff]
        %v622 = vld [vmem:[%s5] sm:$0xff]
        %624 = vset.pattern.permute.xlu0 0
        %625 = vperm.xlu0 %624, %v622
        %v626 = vpop.permute.xlu0 %625
        %628 = vmatprep.subr.mxu0 0.0
        %629 = vmatpush1.xpose.msra.mxu0 %v605
        %630 = vmatprep.subr.mxu0 0.0
        %631 = vmatpush1.xpose.msra.mxu0 %v606
        %632 = vmatprep.subr.mxu0 0.0
        %633 = vmatpush1.xpose.msra.mxu0 %v607
        %634 = vmatprep.subr.mxu0 0.0
        %635 = vmatpush1.xpose.msra.mxu0 %v608
        %636 = vmatprep.subr.mxu0 0.0
        %637 = vmatpush1.xpose.msra.mxu0 %v609
        %638 = vmatprep.subr.mxu0 0.0
        %639 = vmatpush1.xpose.msra.mxu0 %v610
        %640 = vmatprep.subr.mxu0 0.0
        %641 = vmatpush1.xpose.msra.mxu0 %v611
        %642 = vmatprep.subr.mxu0 0.0
        %643 = vmatpush1.xpose.msra.mxu0 %v612
        %644 = vmatprep.subr.mxu0 0.0
        %645 = vmatpush1.xpose.msra.mxu0 %v613
        %646 = vmatprep.subr.mxu0 0.0
        %647 = vmatpush1.xpose.msra.mxu0 %v614
        %648 = vmatprep.subr.mxu0 0.0
        %649 = vmatpush1.xpose.msra.mxu0 %v615
        %650 = vmatprep.subr.mxu0 0.0
        %651 = vmatpush1.xpose.msra.mxu0 %v616
        %652 = vmatprep.subr.mxu0 0.0
        %653 = vmatpush1.xpose.msra.mxu0 %v617
        %654 = vmatprep.subr.mxu0 0.0
        %655 = vmatpush1.xpose.msra.mxu0 %v618
        %656 = vmatprep.subr.mxu0 0.0
        %657 = vmatpush1.xpose.msra.mxu0 %v619
        %658 = vmatprep.subr.mxu0 0.0
        %659 = vmatpush1.xpose.msra.mxu0 %v620
        %660 = vmatprep.subr.mxu0 0.0
        %661 = vmatpush1.xpose.msra.mxu0 0.0
        %662 = vmatprep.subr.mxu0 0.0
        %663 = vmatpush1.xpose.msra.mxu0 0.0
        %664 = vmatprep.subr.mxu0 0.0
        %665 = vmatpush1.xpose.msra.mxu0 0.0
        %666 = vmatprep.subr.mxu0 0.0
        %667 = vmatpush1.xpose.msra.mxu0 0.0
        %668 = vmatprep.subr.mxu0 0.0
        %669 = vmatpush1.xpose.msra.mxu0 0.0
        %670 = vmatprep.subr.mxu0 0.0
        %671 = vmatpush1.xpose.msra.mxu0 0.0
        %672 = vmatprep.subr.mxu0 0.0
        %673 = vmatpush1.xpose.msra.mxu0 0.0
        %674 = vmatprep.subr.mxu0 0.0
        %675 = vmatpush1.xpose.msra.mxu0 0.0
        %676 = vmatprep.subr.mxu0 0.0
        %677 = vmatpush1.xpose.msra.mxu0 0.0
        %678 = vmatprep.subr.mxu0 0.0
        %679 = vmatpush1.xpose.msra.mxu0 0.0
        %680 = vmatprep.subr.mxu0 0.0
        %681 = vmatpush1.xpose.msra.mxu0 0.0
        %682 = vmatprep.subr.mxu0 0.0
        %683 = vmatpush1.xpose.msra.mxu0 0.0
        %684 = vmatprep.subr.mxu0 0.0
        %685 = vmatpush1.xpose.msra.mxu0 0.0
        %686 = vmatprep.subr.mxu0 0.0
        %687 = vmatpush1.xpose.msra.mxu0 0.0
        %688 = vmatprep.subr.mxu0 0.0
        %689 = vmatpush1.xpose.msra.mxu0 0.0
        %690 = vmatprep.subr.mxu0 0.0
        %691 = vmatpush1.xpose.msra.mxu0 0.0
        %692 = vmatprep.mubr.f32.mxu0 0.0
        %693 = vmatmul.mubr.f32.gmra.mrb[0].mxu0 %v621
        %v694 = vpop.f32.mrb[0].mxu0
        %v695 = vadd.f32 %v626, %v694
        %v696 = vpop.f32.mrb[0].mxu0
        %697 = vdwg.mxu0
        %v698 = vmax.f32 %v695, 0.0
        %699 = vrot.lane.b32.xlu0 %v698, 9
        %v700 = vpop.permute.xlu0 %699
        %v701 = vld [vmem:[%s8] sm:$0x1]
        %v703 = vlaneseq
        %v704 = vshrl.u32 %v703, 7
        %v705 = vsub.s32 0, %v704
        %v706 = vrot.slane %v701, %v705
        %v708 = vmul.f32 %v700, %v706
        %709 = vrot.lane.b32.xlu0 %v698, 8
        %v710 = vpop.permute.xlu0 %709
        %s711 = scalar_lea.vmem %s8, 1
        %v712 = vld [vmem:[%s711] sm:$0x1]
        %v714 = vlaneseq
        %v715 = vshrl.u32 %v714, 7
        %v716 = vsub.s32 0, %v715
        %v717 = vrot.slane %v712, %v716
        %v719 = vmul.f32 %v710, %v717
        %720 = vrot.lane.b32.xlu0 %v698, 7
        %v721 = vpop.permute.xlu0 %720
        %s722 = scalar_lea.vmem %s8, 2
        %v723 = vld [vmem:[%s722] sm:$0x1]
        %v725 = vlaneseq
        %v726 = vshrl.u32 %v725, 7
        %v727 = vsub.s32 0, %v726
        %v728 = vrot.slane %v723, %v727
        %v730 = vmul.f32 %v721, %v728
        %731 = vrot.lane.b32.xlu0 %v698, 1
        %v732 = vpop.permute.xlu0 %731
        %s733 = scalar_lea.vmem %s8, 3
        %v734 = vld [vmem:[%s733] sm:$0x1]
        %v736 = vlaneseq
        %v737 = vshrl.u32 %v736, 7
        %v738 = vsub.s32 0, %v737
        %v739 = vrot.slane %v734, %v738
        %v741 = vmul.f32 %v732, %v739
        %742 = vrot.lane.b32.xlu0 %v698, 127
        %v743 = vpop.permute.xlu0 %742
        %s744 = scalar_lea.vmem %s8, 5
        %v745 = vld [vmem:[%s744] sm:$0x1]
        %v747 = vlaneseq
        %v748 = vshrl.u32 %v747, 7
        %v749 = vsub.s32 0, %v748
        %v750 = vrot.slane %v745, %v749
        %v752 = vmul.f32 %v743, %v750
        %753 = vrot.lane.b32.xlu0 %v698, 121
        %v754 = vpop.permute.xlu0 %753
        %s755 = scalar_lea.vmem %s8, 6
        %v756 = vld [vmem:[%s755] sm:$0x1]
        %v758 = vlaneseq
        %v759 = vshrl.u32 %v758, 7
        %v760 = vsub.s32 0, %v759
        %v761 = vrot.slane %v756, %v760
        %v763 = vmul.f32 %v754, %v761
        %764 = vrot.lane.b32.xlu0 %v698, 120
        %v765 = vpop.permute.xlu0 %764
        %s766 = scalar_lea.vmem %s8, 7
        %v767 = vld [vmem:[%s766] sm:$0x1]
        %v769 = vlaneseq
        %v770 = vshrl.u32 %v769, 7
        %v771 = vsub.s32 0, %v770
        %v772 = vrot.slane %v767, %v771
        %v774 = vmul.f32 %v765, %v772
        %775 = vrot.lane.b32.xlu0 %v698, 119
        %v776 = vpop.permute.xlu0 %775
        %s777 = scalar_lea.vmem %s8, 8
        %v778 = vld [vmem:[%s777] sm:$0x1]
        %v780 = vlaneseq
        %v781 = vshrl.u32 %v780, 7
        %v782 = vsub.s32 0, %v781
        %v783 = vrot.slane %v778, %v782
        %v785 = vmul.f32 %v776, %v783
        %v786 = vld [vmem:[%s4] sm:$0xff]
        %v787 = vld [vmem:[%s6] sm:$0xff]
        %789 = vset.pattern.permute.xlu0 0
        %790 = vperm.xlu0 %789, %v787
        %v791 = vpop.permute.xlu0 %790
        %vm793 = vcmask 588800
        %v795 = vsel %vm793, %v786, 0
        %797 = vmatprep.subr.mxu0 0.0
        %798 = vmatpush1.msra.mxu0 %v708
        %799 = vmatprep.subr.mxu0 0.0
        %800 = vmatpush1.msra.mxu0 %v719
        %801 = vmatprep.subr.mxu0 0.0
        %802 = vmatpush1.msra.mxu0 %v730
        %803 = vmatprep.subr.mxu0 0.0
        %804 = vmatpush1.msra.mxu0 %v741
        %805 = vmatprep.subr.mxu0 0.0
        %806 = vmatpush1.msra.mxu0 %v698
        %807 = vmatprep.subr.mxu0 0.0
        %808 = vmatpush1.msra.mxu0 %v752
        %809 = vmatprep.subr.mxu0 0.0
        %810 = vmatpush1.msra.mxu0 %v763
        %811 = vmatprep.subr.mxu0 0.0
        %812 = vmatpush1.msra.mxu0 %v774
        %813 = vmatprep.subr.mxu0 0.0
        %814 = vmatpush1.msra.mxu0 %v785
        %815 = vmatprep.subr.mxu0 0.0
        %816 = vmatpush1.msra.mxu0 0.0
        %817 = vmatprep.subr.mxu0 0.0
        %818 = vmatpush1.msra.mxu0 0.0
        %819 = vmatprep.subr.mxu0 0.0
        %820 = vmatpush1.msra.mxu0 0.0
        %821 = vmatprep.subr.mxu0 0.0
        %822 = vmatpush1.msra.mxu0 0.0
        %823 = vmatprep.subr.mxu0 0.0
        %824 = vmatpush1.msra.mxu0 0.0
        %825 = vmatprep.subr.mxu0 0.0
        %826 = vmatpush1.msra.mxu0 0.0
        %827 = vmatprep.subr.mxu0 0.0
        %828 = vmatpush1.msra.mxu0 0.0
        %829 = vmatprep.subr.mxu0 0.0
        %830 = vmatpush1.msra.mxu0 0.0
        %831 = vmatprep.subr.mxu0 0.0
        %832 = vmatpush1.msra.mxu0 0.0
        %833 = vmatprep.subr.mxu0 0.0
        %834 = vmatpush1.msra.mxu0 0.0
        %835 = vmatprep.subr.mxu0 0.0
        %836 = vmatpush1.msra.mxu0 0.0
        %837 = vmatprep.subr.mxu0 0.0
        %838 = vmatpush1.msra.mxu0 0.0
        %839 = vmatprep.subr.mxu0 0.0
        %840 = vmatpush1.msra.mxu0 0.0
        %841 = vmatprep.subr.mxu0 0.0
        %842 = vmatpush1.msra.mxu0 0.0
        %843 = vmatprep.subr.mxu0 0.0
        %844 = vmatpush1.msra.mxu0 0.0
        %845 = vmatprep.subr.mxu0 0.0
        %846 = vmatpush1.msra.mxu0 0.0
        %847 = vmatprep.subr.mxu0 0.0
        %848 = vmatpush1.msra.mxu0 0.0
        %849 = vmatprep.subr.mxu0 0.0
        %850 = vmatpush1.msra.mxu0 0.0
        %851 = vmatprep.subr.mxu0 0.0
        %852 = vmatpush1.msra.mxu0 0.0
        %853 = vmatprep.subr.mxu0 0.0
        %854 = vmatpush1.msra.mxu0 0.0
        %855 = vmatprep.subr.mxu0 0.0
        %856 = vmatpush1.msra.mxu0 0.0
        %857 = vmatprep.subr.mxu0 0.0
        %858 = vmatpush1.msra.mxu0 0.0
        %859 = vmatprep.subr.mxu0 0.0
        %860 = vmatpush1.msra.mxu0 0.0
        %861 = vmatprep.mubr.f32.mxu0 0.0
        %862 = vmatmul.mubr.f32.gmra.mrb[0].mxu0 %v795
        %v863 = vpop.f32.mrb[0].mxu0
        %v864 = vadd.f32 %v791, %v863
        %v865 = vpop.f32.mrb[0].mxu0
        %866 = vdwg.mxu0
        %v867 = vmax.f32 %v864, 0.0
        %v868 = vld [vmem:[%s7] sm:$0xff]
        %869 = vxpose.xlu0.b32.start [1/16] %v867, 128
        %870 = vxpose.xlu0.b32.cont [2/16] 0.0, 128
        %871 = vxpose.xlu0.b32.cont [3/16] 0.0, 128
        %872 = vxpose.xlu0.b32.cont [4/16] 0.0, 128
        %873 = vxpose.xlu0.b32.cont [5/16] 0.0, 128
        %874 = vxpose.xlu0.b32.cont [6/16] 0.0, 128
        %875 = vxpose.xlu0.b32.cont [7/16] 0.0, 128
        %876 = vxpose.xlu0.b32.cont [8/16] 0.0, 128
        %877 = vxpose.xlu0.b32.cont [9/16] 0.0, 128
        %878 = vxpose.xlu0.b32.cont [10/16] 0.0, 128
        %879 = vxpose.xlu0.b32.cont [11/16] 0.0, 128
        %880 = vxpose.xlu0.b32.cont [12/16] 0.0, 128
        %881 = vxpose.xlu0.b32.cont [13/16] 0.0, 128
        %882 = vxpose.xlu0.b32.cont [14/16] 0.0, 128
        %883 = vxpose.xlu0.b32.cont [15/16] 0.0, 128
        %884 = vxpose.xlu0.b32.end [16/16] 0.0, 128
        %v885 = vpop.trf.xlu0
        %v886 = vpop.trf.xlu0
        %v887 = vpop.trf.xlu0
        %v888 = vpop.trf.xlu0
        %v889 = vpop.trf.xlu0
        %v890 = vpop.trf.xlu0
        %v891 = vpop.trf.xlu0
        %v892 = vpop.trf.xlu0
        %v893 = vpop.trf.xlu0
        %v894 = vpop.trf.xlu0
        %v895 = vpop.trf.xlu0
        %v896 = vpop.trf.xlu0
        %v897 = vpop.trf.xlu0
        %v898 = vpop.trf.xlu0
        %v899 = vpop.trf.xlu0
        %v900 = vpop.trf.xlu0
        %v902 = vsel %vm492, %v885, 0
        %v905 = vsel %vm492, %v886, 0
        %v908 = vsel %vm492, %v887, 0
        %v911 = vsel %vm492, %v888, 0
        %v914 = vsel %vm492, %v889, 0
        %v917 = vsel %vm492, %v890, 0
        %v920 = vsel %vm492, %v891, 0
        %v923 = vsel %vm492, %v892, 0
        %v926 = vsel %vm492, %v893, 0
        %v929 = vsel %vm492, %v894, 0
        %v932 = vsel %vm492, %v895, 0
        %v935 = vsel %vm492, %v896, 0
        %v938 = vsel %vm492, %v897, 0
        %v941 = vsel %vm492, %v898, 0
        %v944 = vsel %vm492, %v899, 0
        %v947 = vsel %vm492, %v900, 0
        %949 = vmatprep.subr.mxu0 0.0
        %950 = vmatpush1.msra.mxu0 %v868
        %951 = vmatprep.subr.mxu0 0.0
        %952 = vmatpush1.msra.mxu0 0.0
        %953 = vmatprep.subr.mxu0 0.0
        %954 = vmatpush1.msra.mxu0 0.0
        %955 = vmatprep.subr.mxu0 0.0
        %956 = vmatpush1.msra.mxu0 0.0
        %957 = vmatprep.subr.mxu0 0.0
        %958 = vmatpush1.msra.mxu0 0.0
        %959 = vmatprep.subr.mxu0 0.0
        %960 = vmatpush1.msra.mxu0 0.0
        %961 = vmatprep.subr.mxu0 0.0
        %962 = vmatpush1.msra.mxu0 0.0
        %963 = vmatprep.subr.mxu0 0.0
        %964 = vmatpush1.msra.mxu0 0.0
        %965 = vmatprep.subr.mxu0 0.0
        %966 = vmatpush1.msra.mxu0 0.0
        %967 = vmatprep.subr.mxu0 0.0
        %968 = vmatpush1.msra.mxu0 0.0
        %969 = vmatprep.subr.mxu0 0.0
        %970 = vmatpush1.msra.mxu0 0.0
        %971 = vmatprep.subr.mxu0 0.0
        %972 = vmatpush1.msra.mxu0 0.0
        %973 = vmatprep.subr.mxu0 0.0
        %974 = vmatpush1.msra.mxu0 0.0
        %975 = vmatprep.subr.mxu0 0.0
        %976 = vmatpush1.msra.mxu0 0.0
        %977 = vmatprep.subr.mxu0 0.0
        %978 = vmatpush1.msra.mxu0 0.0
        %979 = vmatprep.subr.mxu0 0.0
        %980 = vmatpush1.msra.mxu0 0.0
        %981 = vmatprep.subr.mxu0 0.0
        %982 = vmatpush1.msra.mxu0 0.0
        %983 = vmatprep.subr.mxu0 0.0
        %984 = vmatpush1.msra.mxu0 0.0
        %985 = vmatprep.subr.mxu0 0.0
        %986 = vmatpush1.msra.mxu0 0.0
        %987 = vmatprep.subr.mxu0 0.0
        %988 = vmatpush1.msra.mxu0 0.0
        %989 = vmatprep.subr.mxu0 0.0
        %990 = vmatpush1.msra.mxu0 0.0
        %991 = vmatprep.subr.mxu0 0.0
        %992 = vmatpush1.msra.mxu0 0.0
        %993 = vmatprep.subr.mxu0 0.0
        %994 = vmatpush1.msra.mxu0 0.0
        %995 = vmatprep.subr.mxu0 0.0
        %996 = vmatpush1.msra.mxu0 0.0
        %997 = vmatprep.subr.mxu0 0.0
        %998 = vmatpush1.msra.mxu0 0.0
        %999 = vmatprep.subr.mxu0 0.0
        %1000 = vmatpush1.msra.mxu0 0.0
        %1001 = vmatprep.subr.mxu0 0.0
        %1002 = vmatpush1.msra.mxu0 0.0
        %1003 = vmatprep.subr.mxu0 0.0
        %1004 = vmatpush1.msra.mxu0 0.0
        %1005 = vmatprep.subr.mxu0 0.0
        %1006 = vmatpush1.msra.mxu0 0.0
        %1007 = vmatprep.subr.mxu0 0.0
        %1008 = vmatpush1.msra.mxu0 0.0
        %1009 = vmatprep.subr.mxu0 0.0
        %1010 = vmatpush1.msra.mxu0 0.0
        %1011 = vmatprep.subr.mxu0 0.0
        %1012 = vmatpush1.msra.mxu0 0.0
        %1013 = vmatprep.mubr.f32.mxu0 0.0
        %1014 = vmatmul.mubr.f32.gmra.mrb[0].mxu0 %v902
        %v1015 = vpop.f32.mrb[0].mxu0
        %v1016 = vadd.f32 0.0, %v1015
        %v1017 = vpop.f32.mrb[0].mxu0
        %1018 = vmatprep.mubr.f32.mxu0 0.0
        %1019 = vmatmul.mubr.f32.gmra.mrb[0].mxu0 %v905
        %v1020 = vpop.f32.mrb[0].mxu0
        %v1021 = vadd.f32 0.0, %v1020
        %v1022 = vpop.f32.mrb[0].mxu0
        %1023 = vmatprep.mubr.f32.mxu0 0.0
        %1024 = vmatmul.mubr.f32.gmra.mrb[0].mxu0 %v908
        %v1025 = vpop.f32.mrb[0].mxu0
        %v1026 = vadd.f32 0.0, %v1025
        %v1027 = vpop.f32.mrb[0].mxu0
        %1028 = vmatprep.mubr.f32.mxu0 0.0
        %1029 = vmatmul.mubr.f32.gmra.mrb[0].mxu0 %v911
        %v1030 = vpop.f32.mrb[0].mxu0
        %v1031 = vadd.f32 0.0, %v1030
        %v1032 = vpop.f32.mrb[0].mxu0
        %1033 = vmatprep.mubr.f32.mxu0 0.0
        %1034 = vmatmul.mubr.f32.gmra.mrb[0].mxu0 %v914
        %v1035 = vpop.f32.mrb[0].mxu0
        %v1036 = vadd.f32 0.0, %v1035
        %v1037 = vpop.f32.mrb[0].mxu0
        %1038 = vmatprep.mubr.f32.mxu0 0.0
        %1039 = vmatmul.mubr.f32.gmra.mrb[0].mxu0 %v917
        %v1040 = vpop.f32.mrb[0].mxu0
        %v1041 = vadd.f32 0.0, %v1040
        %v1042 = vpop.f32.mrb[0].mxu0
        %1043 = vmatprep.mubr.f32.mxu0 0.0
        %1044 = vmatmul.mubr.f32.gmra.mrb[0].mxu0 %v920
        %v1045 = vpop.f32.mrb[0].mxu0
        %v1046 = vadd.f32 0.0, %v1045
        %v1047 = vpop.f32.mrb[0].mxu0
        %1048 = vmatprep.mubr.f32.mxu0 0.0
        %1049 = vmatmul.mubr.f32.gmra.mrb[0].mxu0 %v923
        %v1050 = vpop.f32.mrb[0].mxu0
        %v1051 = vadd.f32 0.0, %v1050
        %v1052 = vpop.f32.mrb[0].mxu0
        %1053 = vmatprep.mubr.f32.mxu0 0.0
        %1054 = vmatmul.mubr.f32.gmra.mrb[0].mxu0 %v926
        %v1055 = vpop.f32.mrb[0].mxu0
        %v1056 = vadd.f32 0.0, %v1055
        %v1057 = vpop.f32.mrb[0].mxu0
        %1058 = vmatprep.mubr.f32.mxu0 0.0
        %1059 = vmatmul.mubr.f32.gmra.mrb[0].mxu0 %v929
        %v1060 = vpop.f32.mrb[0].mxu0
        %v1061 = vadd.f32 0.0, %v1060
        %v1062 = vpop.f32.mrb[0].mxu0
        %1063 = vmatprep.mubr.f32.mxu0 0.0
        %1064 = vmatmul.mubr.f32.gmra.mrb[0].mxu0 %v932
        %v1065 = vpop.f32.mrb[0].mxu0
        %v1066 = vadd.f32 0.0, %v1065
        %v1067 = vpop.f32.mrb[0].mxu0
        %1068 = vmatprep.mubr.f32.mxu0 0.0
        %1069 = vmatmul.mubr.f32.gmra.mrb[0].mxu0 %v935
        %v1070 = vpop.f32.mrb[0].mxu0
        %v1071 = vadd.f32 0.0, %v1070
        %v1072 = vpop.f32.mrb[0].mxu0
        %1073 = vmatprep.mubr.f32.mxu0 0.0
        %1074 = vmatmul.mubr.f32.gmra.mrb[0].mxu0 %v938
        %v1075 = vpop.f32.mrb[0].mxu0
        %v1076 = vadd.f32 0.0, %v1075
        %v1077 = vpop.f32.mrb[0].mxu0
        %1078 = vmatprep.mubr.f32.mxu0 0.0
        %1079 = vmatmul.mubr.f32.gmra.mrb[0].mxu0 %v941
        %v1080 = vpop.f32.mrb[0].mxu0
        %v1081 = vadd.f32 0.0, %v1080
        %v1082 = vpop.f32.mrb[0].mxu0
        %1083 = vmatprep.mubr.f32.mxu0 0.0
        %1084 = vmatmul.mubr.f32.gmra.mrb[0].mxu0 %v944
        %v1085 = vpop.f32.mrb[0].mxu0
        %v1086 = vadd.f32 0.0, %v1085
        %v1087 = vpop.f32.mrb[0].mxu0
        %1088 = vmatprep.mubr.f32.mxu0 0.0
        %1089 = vmatmul.mubr.f32.gmra.mrb[0].mxu0 %v947
        %v1090 = vpop.f32.mrb[0].mxu0
        %v1091 = vadd.f32 0.0, %v1090
        %v1092 = vpop.f32.mrb[0].mxu0
        %1093 = vdwg.mxu0
        %v1094 = vxor.u32 %v1016, 2147483648
        %v1095 = vxor.u32 %v1021, 2147483648
        %v1096 = vxor.u32 %v1026, 2147483648
        %v1097 = vxor.u32 %v1031, 2147483648
        %v1098 = vxor.u32 %v1036, 2147483648
        %v1099 = vxor.u32 %v1041, 2147483648
        %v1100 = vxor.u32 %v1046, 2147483648
        %v1101 = vxor.u32 %v1051, 2147483648
        %v1102 = vxor.u32 %v1056, 2147483648
        %v1103 = vxor.u32 %v1061, 2147483648
        %v1104 = vxor.u32 %v1066, 2147483648
        %v1105 = vxor.u32 %v1071, 2147483648
        %v1106 = vxor.u32 %v1076, 2147483648
        %v1107 = vxor.u32 %v1081, 2147483648
        %v1108 = vxor.u32 %v1086, 2147483648
        %v1109 = vxor.u32 %v1091, 2147483648
        %v1110 = vmul.f32 %v1094, 1.442695
        %v1111 = vpow.pop %v1110
        %v1112 = vmul.f32 %v1095, 1.442695
        %v1113 = vpow.pop %v1112
        %v1114 = vmul.f32 %v1096, 1.442695
        %v1115 = vpow.pop %v1114
        %v1116 = vmul.f32 %v1097, 1.442695
        %v1117 = vpow.pop %v1116
        %v1118 = vmul.f32 %v1098, 1.442695
        %v1119 = vpow.pop %v1118
        %v1120 = vmul.f32 %v1099, 1.442695
        %v1121 = vpow.pop %v1120
        %v1122 = vmul.f32 %v1100, 1.442695
        %v1123 = vpow.pop %v1122
        %v1124 = vmul.f32 %v1101, 1.442695
        %v1125 = vpow.pop %v1124
        %v1126 = vmul.f32 %v1102, 1.442695
        %v1127 = vpow.pop %v1126
        %v1128 = vmul.f32 %v1103, 1.442695
        %v1129 = vpow.pop %v1128
        %v1130 = vmul.f32 %v1104, 1.442695
        %v1131 = vpow.pop %v1130
        %v1132 = vmul.f32 %v1105, 1.442695
        %v1133 = vpow.pop %v1132
        %v1134 = vmul.f32 %v1106, 1.442695
        %v1135 = vpow.pop %v1134
        %v1136 = vmul.f32 %v1107, 1.442695
        %v1137 = vpow.pop %v1136
        %v1138 = vmul.f32 %v1108, 1.442695
        %v1139 = vpow.pop %v1138
        %v1140 = vmul.f32 %v1109, 1.442695
        %v1141 = vpow.pop %v1140
        %v1142 = vadd.f32 %v1111, 1.0
        %v1143 = vadd.f32 %v1113, 1.0
        %v1144 = vadd.f32 %v1115, 1.0
        %v1145 = vadd.f32 %v1117, 1.0
        %v1146 = vadd.f32 %v1119, 1.0
        %v1147 = vadd.f32 %v1121, 1.0
        %v1148 = vadd.f32 %v1123, 1.0
        %v1149 = vadd.f32 %v1125, 1.0
        %v1150 = vadd.f32 %v1127, 1.0
        %v1151 = vadd.f32 %v1129, 1.0
        %v1152 = vadd.f32 %v1131, 1.0
        %v1153 = vadd.f32 %v1133, 1.0
        %v1154 = vadd.f32 %v1135, 1.0
        %v1155 = vadd.f32 %v1137, 1.0
        %v1156 = vadd.f32 %v1139, 1.0
        %v1157 = vadd.f32 %v1141, 1.0
        %v1158 = vrcp.pop %v1142
        %v1159 = vmul.f32 1.0, %v1158
        %v1160 = vrcp.pop %v1143
        %v1161 = vmul.f32 1.0, %v1160
        %v1162 = vrcp.pop %v1144
        %v1163 = vmul.f32 1.0, %v1162
        %v1164 = vrcp.pop %v1145
        %v1165 = vmul.f32 1.0, %v1164
        %v1166 = vrcp.pop %v1146
        %v1167 = vmul.f32 1.0, %v1166
        %v1168 = vrcp.pop %v1147
        %v1169 = vmul.f32 1.0, %v1168
        %v1170 = vrcp.pop %v1148
        %v1171 = vmul.f32 1.0, %v1170
        %v1172 = vrcp.pop %v1149
        %v1173 = vmul.f32 1.0, %v1172
        %v1174 = vrcp.pop %v1150
        %v1175 = vmul.f32 1.0, %v1174
        %v1176 = vrcp.pop %v1151
        %v1177 = vmul.f32 1.0, %v1176
        %v1178 = vrcp.pop %v1152
        %v1179 = vmul.f32 1.0, %v1178
        %v1180 = vrcp.pop %v1153
        %v1181 = vmul.f32 1.0, %v1180
        %v1182 = vrcp.pop %v1154
        %v1183 = vmul.f32 1.0, %v1182
        %v1184 = vrcp.pop %v1155
        %v1185 = vmul.f32 1.0, %v1184
        %v1186 = vrcp.pop %v1156
        %v1187 = vmul.f32 1.0, %v1186
        %v1188 = vrcp.pop %v1157
        %v1189 = vmul.f32 1.0, %v1188
        %1191 = vset.pattern.permute.xlu0 0
        %1192 = vperm.xlu0 %1191, %v1159
        %v1193 = vpop.permute.xlu0 %1192
        %1196 = vset.pattern.permute.xlu0 0
        %1197 = vperm.xlu0 %1196, %v1161
        %v1198 = vpop.permute.xlu0 %1197
        %1201 = vset.pattern.permute.xlu0 0
        %1202 = vperm.xlu0 %1201, %v1163
        %v1203 = vpop.permute.xlu0 %1202
        %1206 = vset.pattern.permute.xlu0 0
        %1207 = vperm.xlu0 %1206, %v1165
        %v1208 = vpop.permute.xlu0 %1207
        %1211 = vset.pattern.permute.xlu0 0
        %1212 = vperm.xlu0 %1211, %v1167
        %v1213 = vpop.permute.xlu0 %1212
        %1216 = vset.pattern.permute.xlu0 0
        %1217 = vperm.xlu0 %1216, %v1169
        %v1218 = vpop.permute.xlu0 %1217
        %1221 = vset.pattern.permute.xlu0 0
        %1222 = vperm.xlu0 %1221, %v1171
        %v1223 = vpop.permute.xlu0 %1222
        %1226 = vset.pattern.permute.xlu0 0
        %1227 = vperm.xlu0 %1226, %v1173
        %v1228 = vpop.permute.xlu0 %1227
        %1231 = vset.pattern.permute.xlu0 0
        %1232 = vperm.xlu0 %1231, %v1175
        %v1233 = vpop.permute.xlu0 %1232
        %1236 = vset.pattern.permute.xlu0 0
        %1237 = vperm.xlu0 %1236, %v1177
        %v1238 = vpop.permute.xlu0 %1237
        %1241 = vset.pattern.permute.xlu0 0
        %1242 = vperm.xlu0 %1241, %v1179
        %v1243 = vpop.permute.xlu0 %1242
        %1246 = vset.pattern.permute.xlu0 0
        %1247 = vperm.xlu0 %1246, %v1181
        %v1248 = vpop.permute.xlu0 %1247
        %1251 = vset.pattern.permute.xlu0 0
        %1252 = vperm.xlu0 %1251, %v1183
        %v1253 = vpop.permute.xlu0 %1252
        %1256 = vset.pattern.permute.xlu0 0
        %1257 = vperm.xlu0 %1256, %v1185
        %v1258 = vpop.permute.xlu0 %1257
        %1261 = vset.pattern.permute.xlu0 0
        %1262 = vperm.xlu0 %1261, %v1187
        %v1263 = vpop.permute.xlu0 %1262
        %1266 = vset.pattern.permute.xlu0 0
        %1267 = vperm.xlu0 %1266, %v1189
        %v1268 = vpop.permute.xlu0 %1267
        %v1270 = vmul.f32 %v605, %v1193
        %v1271 = vmul.f32 %v606, %v1198
        %v1272 = vmul.f32 %v607, %v1203
        %v1273 = vmul.f32 %v608, %v1208
        %v1274 = vmul.f32 %v609, %v1213
        %v1275 = vmul.f32 %v610, %v1218
        %v1276 = vmul.f32 %v611, %v1223
        %v1277 = vmul.f32 %v612, %v1228
        %v1278 = vmul.f32 %v613, %v1233
        %v1279 = vmul.f32 %v614, %v1238
        %v1280 = vmul.f32 %v615, %v1243
        %v1281 = vmul.f32 %v616, %v1248
        %v1282 = vmul.f32 %v617, %v1253
        %v1283 = vmul.f32 %v618, %v1258
        %v1284 = vmul.f32 %v619, %v1263
        %v1285 = vmul.f32 %v620, %v1268
        %1286 = vst [vmem:[%s351] sm:$0xff] %v1270
        %1287 = vst [vmem:[%s351 + $0x8] sm:$0xff] %v1271
        %1288 = vst [vmem:[%s351 + $0x10] sm:$0xff] %v1272
        %1289 = vst [vmem:[%s351 + $0x18] sm:$0xff] %v1273
        %1290 = vst [vmem:[%s351 + $0x20] sm:$0xff] %v1274
        %1291 = vst [vmem:[%s351 + $0x28] sm:$0xff] %v1275
        %1292 = vst [vmem:[%s351 + $0x30] sm:$0xff] %v1276
        %1293 = vst [vmem:[%s351 + $0x38] sm:$0xff] %v1277
        %1294 = vst [vmem:[%s351 + $0x40] sm:$0xff] %v1278
        %1295 = vst [vmem:[%s351 + $0x48] sm:$0xff] %v1279
        %1296 = vst [vmem:[%s351 + $0x50] sm:$0xff] %v1280
        %1297 = vst [vmem:[%s351 + $0x58] sm:$0xff] %v1281
        %1298 = vst [vmem:[%s351 + $0x60] sm:$0xff] %v1282
        %1299 = vst [vmem:[%s351 + $0x68] sm:$0xff] %v1283
        %1300 = vst [vmem:[%s351 + $0x70] sm:$0xff] %v1284
        %1301 = vst [vmem:[%s351 + $0x78] sm:$0xff] %v1285
        %s1302 = sand.u32 %s228, 1
        %s1303 = scalar_lea.sflag [#allocation4], %s1302
        %s1304 = sand.u32 %s228, 1
        %s1305 = smul.addr %s1304, 128
        %s1306 = scalar_lea.vmem [#allocation5], %s1305
        // Predicated region
        $region61: #{tpu_custom_call.1} parent=55 // pred_check
          %p1307 = pneg %p238
        $region62: #{tpu_custom_call.1} parent=55 // pred_check_branch
          %1309 = sbr.rel (%p1307) target = $region64
        $region63: #{tpu_custom_call.1} parent=55 // pred_region
          %s1310 = smul.u32 2, %s26
          %s1312 = ssub.s32 2048, 2048
          %1313 = vsyncadd %s1303, %s1312
          %s1314 = smul.addr %s1310, 8
          %s1315 = smul.addr %s1314, 128
          %s1316 = scalar_lea.hbm %s9, %s1315
          %s1317 = sshll.u32 %s1306, 4
          %s1318 = int_to_ptr.vmem [resolvable:$true] %s1317
          %1323 = dma.vmem_to_hbm [thread:$0]  %s1318, 2048, %s1316, %s1303, 128, 128, 8
        $region64: #{tpu_custom_call.1} parent=55 // pred_fallthru
          _
      $region56: #{tpu_custom_call.1} parent=5 // pred_fallthru
        _
      %p1324 = scmp.le.s32.totalorder 2, %s21
      // Predicated region
      $region65: #{tpu_custom_call.1} parent=5 // pred_check
        %p1325 = pneg %p1324
      $region66: #{tpu_custom_call.1} parent=5 // pred_check_branch
        %1327 = sbr.rel (%p1325) target = $region68
      $region67: #{tpu_custom_call.1} parent=5 // pred_region
        %s1328 = ssub.s32 %s21, 2
        // Predicated region
        $region69: #{tpu_custom_call.1} parent=67 // pred_check
          %p1329 = pneg %p244
        $region70: #{tpu_custom_call.1} parent=67 // pred_check_branch
          %1331 = sbr.rel (%p1329) target = $region72
        $region71: #{tpu_custom_call.1} parent=67 // pred_region
          %s1332 = sand.u32 %s229, 1
          %s1333 = scalar_lea.sflag [#allocation4], %s1332
          %s1334 = sand.u32 %s229, 1
          %s1335 = smul.addr %s1334, 128
          %s1336 = scalar_lea.vmem [#allocation5], %s1335
          %1337 = dma.done %s1333, 2048
        $region72: #{tpu_custom_call.1} parent=67 // pred_fallthru
          _
      $region68: #{tpu_custom_call.1} parent=5 // pred_fallthru
        _
    $region6: #{tpu_custom_call.1} parent=1 // loop_footer
      %s25 = sadd.s32 1, %s21
    $region7: #{tpu_custom_call.1} parent=1 // loop_footer_branch
      %20 = sbr.rel target = $region3
    $region8: #{tpu_custom_call.1} parent=1 // loop_exit
      _
    %1338 = vsyncpa [#allocation3], 1
    %s1339 = scalar_lea.sflag [#allocation3], 1
    %1340 = vsyncpa %s1339, 1
    %1341 = vsyncpa [#allocation4], 1
    %s1342 = scalar_lea.sflag [#allocation4], 1
    %1343 = vsyncpa %s1342, 1

</llo_original>
